<compile_context>
chip_gen: v7x
topology: tpu7x:2x2x1
jax: 0.10.0
libtpu: 0.0.40
codegen_flags: <defaults>
</compile_context>

<pallas_src>
import math

import jax
import jax.numpy as jnp
from jax.experimental import pallas as pl
from jax.experimental.pallas import tpu as pltpu


def _round_up(x, m):
    return ((x + m - 1) // m) * m


# ---------------------------------------------------------------------------
# Kernel: full teacher-forced decode loop (grid axis 0 = decode step)
# ---------------------------------------------------------------------------
def _decode_kernel(motion_ref, hid0_ref, enc_ref, encp_ref,
                   w_hid_ref, w_pre_ref, w_gi_ref, w_out_ref, vec_ref,
                   out_ref, hid_out_ref, attn_out_ref,
                   hid_scratch):
    f32 = jnp.float32
    B, D = motion_ref.shape
    H = hid_scratch.shape[1]

    step = pl.program_id(0)

    @pl.when(step == 0)
    def _():
        hid_scratch[...] = hid0_ref[...]          # init carried hidden from last_hidden[-1]

    motion = motion_ref[...]                      # [B, D]
    hidden = hid_scratch[...]                     # [B, H]
    enc = enc_ref[...]                            # [B, T, H]
    encp = encp_ref[...]                          # [B, T, H]  precomputed enc @ W_e + attn_b

    # bias/scale rows pre-broadcast to B sublanes in the packed slab
    v      = vec_ref[0 * B:1 * B, :H]             # [B, H]
    pre_b  = vec_ref[1 * B:2 * B, :H]             # [B, H]
    bn_g   = vec_ref[2 * B:3 * B, :H]             # [B, H]
    bn_b   = vec_ref[3 * B:4 * B, :H]             # [B, H]
    bi_cat = vec_ref[4 * B:5 * B, :3 * H]         # [B, 3H]  (bi_r | bi_z | bi_n)
    b_hid4 = vec_ref[5 * B:6 * B, :4 * H]         # [B, 4H]  (0_H | bh_r | bh_z | bh_n)
    out_b  = vec_ref[6 * B:7 * B, :D]             # [B, D]

    # ---- fused hidden projections: [attn hidden-proj | GRU hh gates (r,z,n)] ----
    hid_all = jnp.dot(hidden, w_hid_ref[...], preferred_element_type=f32) + b_hid4  # [B,4H]
    hid_proj = hid_all[:, :H]
    gh_r = hid_all[:, H:2 * H]
    gh_z = hid_all[:, 2 * H:3 * H]
    gh_n = hid_all[:, 3 * H:4 * H]                # = hidden @ Wh_n + bh_n (stays inside r*(...))

    # ---- Attn.score + exact softmax over T (attn_weights is user-visible) ----
    energy = jnp.tanh(encp + hid_proj[:, None, :])                    # [B, T, H]
    scores = jnp.sum(energy * v[:, None, :], axis=2)                  # [B, T]
    m = jnp.max(scores, axis=1, keepdims=True)
    e = jnp.exp(scores - m)
    attn = e / jnp.sum(e, axis=1, keepdims=True)                      # [B, T]

    # context = attn_weights.bmm(encoder_outputs.transpose(0,1))  -> [B, H]
    context = jnp.sum(attn[:, :, None] * enc, axis=1)

    # ---- pre_linear: split matmul (no lane concat) + BatchNorm1d (batch stats) + ReLU ----
    y = (jnp.dot(motion, w_pre_ref[:D, :], preferred_element_type=f32)
         + jnp.dot(context, w_pre_ref[D:, :], preferred_element_type=f32)
         + pre_b)
    mean = jnp.mean(y, axis=0, keepdims=True)
    var = jnp.mean((y - mean) * (y - mean), axis=0, keepdims=True)    # biased batch variance
    y = (y - mean) * jax.lax.rsqrt(var + 1e-5)
    y = jnp.maximum(y * bn_g + bn_b, 0.0)                             # [B, H]

    # ---- GRU cell (1 layer, 1 step); input gates in one lane-padded matmul ----
    gi = jnp.dot(y, w_gi_ref[...], preferred_element_type=f32)        # [B, Wg>=3H]
    r = jax.nn.sigmoid(gi[:, :H] + bi_cat[:, :H] + gh_r)
    z = jax.nn.sigmoid(gi[:, H:2 * H] + bi_cat[:, H:2 * H] + gh_z)
    n = jnp.tanh(gi[:, 2 * H:3 * H] + bi_cat[:, 2 * H:3 * H] + r * gh_n)
    h_new = (1.0 - z) * n + z * hidden                                # [B, H]

    # ---- output projection (lane-padded weight, live lanes sliced) ----
    out = jnp.dot(h_new, w_out_ref[...], preferred_element_type=f32)[:, :D] + out_b  # [B, D]

    hid_scratch[...] = h_new
    out_ref[...] = out
    hid_out_ref[...] = h_new
    attn_out_ref[...] = attn


# ---------------------------------------------------------------------------
# Parameters
# ---------------------------------------------------------------------------
def init_params(key, motion_dim, hidden_size):
    """Deterministic synthetic parameters (shapes match the PyTorch module)."""
    D, H = motion_dim, hidden_size
    ks = jax.random.split(key, 11)

    def lin(k, fan_in, shape):
        bound = 1.0 / math.sqrt(fan_in)
        return jax.random.uniform(k, shape, jnp.float32, -bound, bound)

    return dict(
        # Attn: nn.Linear(2H, H) split into hidden / encoder halves (pre-transposed)
        attn_W=lin(ks[0], 2 * H, (2, H, H)),
        attn_b=lin(ks[1], 2 * H, (1, H)),
        v=(jax.random.normal(ks[2], (1, H)) / math.sqrt(H)).astype(jnp.float32),
        # pre_linear: Linear(D+H, H) + BatchNorm1d(H)
        pre_W=lin(ks[3], D + H, (D + H, H)),
        pre_b=lin(ks[4], D + H, (1, H)),
        bn_g=jnp.ones((1, H), jnp.float32),
        bn_b=jnp.zeros((1, H), jnp.float32),
        # GRU(H, H, 1): gate order (r, z, n), weights pre-transposed to [H, H]
        gru_Wi=lin(ks[5], H, (3, H, H)),
        gru_Wh=lin(ks[6], H, (3, H, H)),
        gru_bi=lin(ks[7], H, (3, 1, H)),
        gru_bh=lin(ks[8], H, (3, 1, H)),
        # out: Linear(H, motion_dim)
        out_W=lin(ks[9], H, (H, D)),
        out_b=lin(ks[10], H, (1, D)),
    )


def pack_params(params, motion_dim, hidden_size, batch):
    """One-time repacking into kernel-friendly slabs (lane-padded, B-sublane-broadcast)."""
    D, H, B = motion_dim, hidden_size, batch
    Wg = _round_up(3 * H, 128)
    Wo = _round_up(D, 128)
    Wv = max(4 * H, D)

    Wi, Wh = params['gru_Wi'], params['gru_Wh']
    bi, bh = params['gru_bi'], params['gru_bh']

    w_hid = jnp.concatenate([params['attn_W'][0], Wh[0], Wh[1], Wh[2]], axis=1)   # [H, 4H]
    w_gi = jnp.concatenate([Wi[0], Wi[1], Wi[2]], axis=1)                          # [H, 3H]
    w_gi = jnp.pad(w_gi, ((0, 0), (0, Wg - 3 * H)))                                # [H, Wg]
    w_out = jnp.pad(params['out_W'], ((0, 0), (0, Wo - D)))                        # [H, Wo]

    bi_cat = jnp.concatenate([bi[0], bi[1], bi[2]], axis=1)                        # [1, 3H]
    b_hid4 = jnp.concatenate(
        [jnp.zeros((1, H), jnp.float32), bh[0], bh[1], bh[2]], axis=1)             # [1, 4H]

    def row(x):  # pad to Wv lanes and broadcast to B sublanes
        x = jnp.pad(x, ((0, 0), (0, Wv - x.shape[1])))
        return jnp.broadcast_to(x, (B, Wv))

    vec = jnp.concatenate([
        row(params['v']), row(params['pre_b']), row(params['bn_g']), row(params['bn_b']),
        row(bi_cat), row(b_hid4), row(params['out_b'])], axis=0)                   # [7B, Wv]

    return dict(w_hid=w_hid, w_pre=params['pre_W'], w_gi=w_gi, w_out=w_out,
                vec=vec, attn_W_e=params['attn_W'][1], attn_b=params['attn_b'])


def precompute_encoder(packed, encoder_outputs):
    """Per-sequence (step-invariant) precompute: batch-major encoder + attn projection."""
    enc_bth = jnp.transpose(encoder_outputs, (1, 0, 2))                  # [B, T, H]
    enc_proj = (jnp.einsum('bth,hk->btk', enc_bth, packed['attn_W_e'],
                           preferred_element_type=jnp.float32)
                + packed['attn_b'][None, :, :])                          # [B, T, H]
    return enc_bth, enc_proj


# ---------------------------------------------------------------------------
# pallas_call wrappers
# ---------------------------------------------------------------------------
def generator_decode(packed, motion_seq, last_hidden, enc_bth, enc_proj):
    """Teacher-forced multi-step decode inside ONE pallas_call.

    motion_seq: [S, B, D] per-step motion inputs.
    Returns (outputs [S,B,D], hidden_states [S,B,H], attn_weights [S,B,T]).
    """
    S, B, D = motion_seq.shape
    H = last_hidden.shape[-1]
    T = enc_bth.shape[1]
    hidden0 = last_hidden[-1]                                            # [B, H]  (n_layers == 1)

    def const(shape):        # step-invariant: DMA'd once, resident in VMEM across the grid
        return pl.BlockSpec(shape, lambda s, _n=len(shape): (0,) * _n)

    def per_step(shape):     # one row of the [S, ...] slab per grid step
        return pl.BlockSpec((None,) + shape, lambda s: (s,) + (0,) * len(shape))

    grid_spec = pltpu.PrefetchScalarGridSpec(
        num_scalar_prefetch=0,
        grid=(S,),
        in_specs=[
            per_step((B, D)),                 # motion_seq
            const((B, H)),                    # hidden0
            const((B, T, H)),                 # enc_bth
            const((B, T, H)),                 # enc_proj
            const(packed['w_hid'].shape),
            const(packed['w_pre'].shape),
            const(packed['w_gi'].shape),
            const(packed['w_out'].shape),
            const(packed['vec'].shape),
        ],
        out_specs=[
            per_step((B, D)),                 # per-step decoder output
            per_step((B, H)),                 # per-step hidden
            per_step((B, T)),                 # per-step attention weights
        ],
        scratch_shapes=[pltpu.VMEM((B, H), jnp.float32)],                # carried hidden
    )

    outs, hids, attns = pl.pallas_call(
        _decode_kernel,
        out_shape=(
            jax.ShapeDtypeStruct((S, B, D), jnp.float32),
            jax.ShapeDtypeStruct((S, B, H), jnp.float32),
            jax.ShapeDtypeStruct((S, B, T), jnp.float32),
        ),
        grid_spec=grid_spec,
        compiler_params=pltpu.CompilerParams(dimension_semantics=("arbitrary",)),
    )(motion_seq, hidden0, enc_bth, enc_proj,
      packed['w_hid'], packed['w_pre'], packed['w_gi'],
      packed['w_out'], packed['vec'])
    return outs, hids, attns


def generator_forward_seq(params, motion_seq, last_hidden, encoder_outputs):
    """Multi-step teacher-forced decode (equivalent to calling the module once per step)."""
    S, B, D = motion_seq.shape
    H = last_hidden.shape[-1]
    packed = pack_params(params, D, H, B)
    enc_bth, enc_proj = precompute_encoder(packed, encoder_outputs)
    return generator_decode(packed, motion_seq, last_hidden, enc_bth, enc_proj)


def generator_forward(params, z, motion_input, last_hidden, encoder_outputs):
    """Generator.forward (one step), matching the PyTorch module's contract."""
    assert z is None  # GAN_noise_size == 0 in the reference module
    B, D = motion_input.shape
    H = last_hidden.shape[-1]
    packed = pack_params(params, D, H, B)
    enc_bth, enc_proj = precompute_encoder(packed, encoder_outputs)
    outs, hids, attns = generator_decode(packed, motion_input[None], last_hidden,
                                         enc_bth, enc_proj)
    return outs[0], hids[0][None], attns[0][:, None, :]     # ([B,D], [1,B,H], [B,1,T])


# ---------------------------------------------------------------------------
# Pure-JAX reference (one decode step) for the correctness check
# ---------------------------------------------------------------------------
def _reference(params, motion, last_hidden, enc_tbh):
    hidden = last_hidden[-1]
    enc = jnp.transpose(enc_tbh, (1, 0, 2))
    hid_proj = hidden @ params['attn_W'][0]
    enc_proj = jnp.einsum('bth,hk->btk', enc, params['attn_W'][1])
    energy = jnp.tanh(hid_proj[:, None, :] + enc_proj + params['attn_b'][None])
    scores = jnp.sum(energy * params['v'][None], axis=2)
    attn = jax.nn.softmax(scores, axis=1)
    context = jnp.einsum('bt,bth->bh', attn, enc)
    x = jnp.concatenate([motion, context], axis=1)
    y = x @ params['pre_W'] + params['pre_b']
    mean = jnp.mean(y, 0, keepdims=True)
    var = jnp.mean((y - mean) ** 2, 0, keepdims=True)
    y = (y - mean) / jnp.sqrt(var + 1e-5)
    y = y * params['bn_g'] + params['bn_b']
    y = jnp.maximum(y, 0.0)
    Wi, Wh, bi, bh = params['gru_Wi'], params['gru_Wh'], params['gru_bi'], params['gru_bh']
    r = jax.nn.sigmoid(y @ Wi[0] + bi[0] + hidden @ Wh[0] + bh[0])
    zg = jax.nn.sigmoid(y @ Wi[1] + bi[1] + hidden @ Wh[1] + bh[1])
    n = jnp.tanh(y @ Wi[2] + bi[2] + r * (hidden @ Wh[2] + bh[2]))
    h_new = (1.0 - zg) * n + zg * hidden
    out = h_new @ params['out_W'] + params['out_b']
    return out, h_new[None], attn[:, None, :]


if __name__ == "__main__":
    # 8 decode streams (full f32 sublane group), 8 encoder steps, H=32, D=16, 1 layer, 4 steps
    B, T, H, D, L, S = 8, 8, 32, 16, 1, 4

    key = jax.random.PRNGKey(0)
    kp, k1, k2, k3 = jax.random.split(key, 4)
    params = init_params(kp, D, H)

    motion_seq = jax.random.normal(k1, (S, B, D), jnp.float32)
    last_hidden = jax.random.normal(k2, (L, B, H), jnp.float32)
    encoder_outputs = jax.random.normal(k3, (T, B, H), jnp.float32)

    # Multi-step decode in a single pallas_call (weights resident, hidden carried in VMEM).
    outs, hids, attns = generator_forward_seq(params, motion_seq, last_hidden, encoder_outputs)
    jax.block_until_ready((outs, hids, attns))
    assert outs.shape == (S, B, D) and hids.shape == (S, B, H) and attns.shape == (S, B, T)

    # Reference: call the per-step math S times, carrying the hidden state.
    hid = last_hidden
    for s in range(S):
        ref_out, ref_hid, ref_attn = _reference(params, motion_seq[s], hid, encoder_outputs)
        assert jnp.allclose(outs[s], ref_out, atol=1e-4, rtol=1e-4)
        assert jnp.allclose(hids[s], ref_hid[0], atol=1e-4, rtol=1e-4)
        assert jnp.allclose(attns[s], ref_attn[:, 0, :], atol=1e-4, rtol=1e-4)
        hid = ref_hid

    # One-step wrapper keeps the module's (output, hidden, attn_weights) contract.
    out1, hid1, attn1 = generator_forward(params, None, motion_seq[0], last_hidden,
                                          encoder_outputs)
    jax.block_until_ready((out1, hid1, attn1))
    assert out1.shape == (B, D) and hid1.shape == (1, B, H) and attn1.shape == (B, 1, T)
    r_out, r_hid, r_attn = _reference(params, motion_seq[0], last_hidden, encoder_outputs)
    assert jnp.allclose(out1, r_out, atol=1e-4, rtol=1e-4)
    assert jnp.allclose(hid1, r_hid, atol=1e-4, rtol=1e-4)
    assert jnp.allclose(attn1, r_attn, atol=1e-4, rtol=1e-4)

    print("KERNEL_OK")
</pallas_src>

<mosaic_0001>
module attributes {stable_mosaic.version = 11 : i64} {
  func.func @_decode_kernel(%arg0: i32, %arg1: memref<1x8x16xf32, #tpu.memory_space<vmem>>, %arg2: memref<8x32xf32, #tpu.memory_space<vmem>>, %arg3: memref<8x8x32xf32, #tpu.memory_space<vmem>>, %arg4: memref<8x8x32xf32, #tpu.memory_space<vmem>>, %arg5: memref<32x128xf32, #tpu.memory_space<vmem>>, %arg6: memref<48x32xf32, #tpu.memory_space<vmem>>, %arg7: memref<32x128xf32, #tpu.memory_space<vmem>>, %arg8: memref<32x128xf32, #tpu.memory_space<vmem>>, %arg9: memref<56x128xf32, #tpu.memory_space<vmem>>, %arg10: memref<1x8x16xf32, #tpu.memory_space<vmem>>, %arg11: memref<1x8x32xf32, #tpu.memory_space<vmem>>, %arg12: memref<1x8x8xf32, #tpu.memory_space<vmem>>, %arg13: memref<8x32xf32, #tpu.memory_space<vmem>>) attributes {dimension_semantics = [#tpu.dimension_semantics<arbitrary>], iteration_bounds = array<i64: 4>, scalar_prefetch = 0 : i64, scratch_operands = 1 : i64, tpu.core_type = #tpu.core_type<tc>, window_params = [{transform_indices = @transform_0, window_bounds = array<i64: 1, 8, 16>}, {pipeline_mode = #tpu.pipeline_mode<synchronous>, transform_indices = @transform_1, window_bounds = array<i64: 8, 32>}, {pipeline_mode = #tpu.pipeline_mode<synchronous>, transform_indices = @transform_2, window_bounds = array<i64: 8, 8, 32>}, {pipeline_mode = #tpu.pipeline_mode<synchronous>, transform_indices = @transform_3, window_bounds = array<i64: 8, 8, 32>}, {pipeline_mode = #tpu.pipeline_mode<synchronous>, transform_indices = @transform_4, window_bounds = array<i64: 32, 128>}, {pipeline_mode = #tpu.pipeline_mode<synchronous>, transform_indices = @transform_5, window_bounds = array<i64: 48, 32>}, {pipeline_mode = #tpu.pipeline_mode<synchronous>, transform_indices = @transform_6, window_bounds = array<i64: 32, 128>}, {pipeline_mode = #tpu.pipeline_mode<synchronous>, transform_indices = @transform_7, window_bounds = array<i64: 32, 128>}, {pipeline_mode = #tpu.pipeline_mode<synchronous>, transform_indices = @transform_8, window_bounds = array<i64: 56, 128>}, {transform_indices = @transform_9, window_bounds = array<i64: 1, 8, 16>}, {transform_indices = @transform_10, window_bounds = array<i64: 1, 8, 32>}, {transform_indices = @transform_11, window_bounds = array<i64: 1, 8, 8>}]} {
    %c0_i32 = arith.constant 0 : i32
    %0 = arith.cmpi eq, %arg0, %c0_i32 : i32
    %1 = arith.extui %0 : i1 to i32
    %c0_i32_0 = arith.constant 0 : i32
    %2 = arith.cmpi ne, %1, %c0_i32_0 : i32
    scf.if %2 {
      %c0_57 = arith.constant 0 : index
      %c0_58 = arith.constant 0 : index
      %118 = vector.load %arg2[%c0_57, %c0_58] : memref<8x32xf32, #tpu.memory_space<vmem>>, vector<8x32xf32>
      %c0_59 = arith.constant 0 : index
      %c0_60 = arith.constant 0 : index
      %119 = vector.load %arg13[%c0_59, %c0_60] : memref<8x32xf32, #tpu.memory_space<vmem>>, vector<8x32xf32>
      tpu.vector_store %arg13[%c0_59, %c0_60], %118 {strides = array<i32>} : memref<8x32xf32, #tpu.memory_space<vmem>>, vector<8x32xf32>,
    } else {
    }
    %c0 = arith.constant 0 : index
    %c0_1 = arith.constant 0 : index
    %c0_2 = arith.constant 0 : index
    %3 = vector.load %arg1[%c0, %c0_1, %c0_2] : memref<1x8x16xf32, #tpu.memory_space<vmem>>, vector<1x8x16xf32>
    %4 = vector.shape_cast %3 : vector<1x8x16xf32> to vector<8x16xf32>
    %c0_3 = arith.constant 0 : index
    %c0_4 = arith.constant 0 : index
    %5 = vector.load %arg13[%c0_3, %c0_4] : memref<8x32xf32, #tpu.memory_space<vmem>>, vector<8x32xf32>
    %c0_5 = arith.constant 0 : index
    %c0_6 = arith.constant 0 : index
    %c0_7 = arith.constant 0 : index
    %6 = vector.load %arg3[%c0_5, %c0_6, %c0_7] : memref<8x8x32xf32, #tpu.memory_space<vmem>>, vector<8x8x32xf32>
    %c0_8 = arith.constant 0 : index
    %c0_9 = arith.constant 0 : index
    %c0_10 = arith.constant 0 : index
    %7 = vector.load %arg4[%c0_8, %c0_9, %c0_10] : memref<8x8x32xf32, #tpu.memory_space<vmem>>, vector<8x8x32xf32>
    %c0_11 = arith.constant 0 : index
    %c0_12 = arith.constant 0 : index
    %8 = vector.load %arg9[%c0_11, %c0_12] : memref<56x128xf32, #tpu.memory_space<vmem>>, vector<8x32xf32>
    %c8 = arith.constant 8 : index
    %c0_13 = arith.constant 0 : index
    %9 = vector.load %arg9[%c8, %c0_13] : memref<56x128xf32, #tpu.memory_space<vmem>>, vector<8x32xf32>
    %c16 = arith.constant 16 : index
    %c0_14 = arith.constant 0 : index
    %10 = vector.load %arg9[%c16, %c0_14] : memref<56x128xf32, #tpu.memory_space<vmem>>, vector<8x32xf32>
    %c24 = arith.constant 24 : index
    %c0_15 = arith.constant 0 : index
    %11 = vector.load %arg9[%c24, %c0_15] : memref<56x128xf32, #tpu.memory_space<vmem>>, vector<8x32xf32>
    %c32 = arith.constant 32 : index
    %c0_16 = arith.constant 0 : index
    %12 = vector.load %arg9[%c32, %c0_16] : memref<56x128xf32, #tpu.memory_space<vmem>>, vector<8x96xf32>
    %c40 = arith.constant 40 : index
    %c0_17 = arith.constant 0 : index
    %13 = vector.load %arg9[%c40, %c0_17] : memref<56x128xf32, #tpu.memory_space<vmem>>, vector<8x128xf32>
    %c48 = arith.constant 48 : index
    %c0_18 = arith.constant 0 : index
    %14 = vector.load %arg9[%c48, %c0_18] : memref<56x128xf32, #tpu.memory_space<vmem>>, vector<8x16xf32>
    %c0_19 = arith.constant 0 : index
    %c0_20 = arith.constant 0 : index
    %15 = vector.load %arg5[%c0_19, %c0_20] : memref<32x128xf32, #tpu.memory_space<vmem>>, vector<32x128xf32>
    %cst = arith.constant dense<0.000000e+00> : vector<8x128xf32>
    %16 = tpu.matmul %5, %15, %cst {dimension_numbers = #tpu.dot_dimension_numbers<[1], [0], [0], [1], [0, 0, 1, 1], [], []>} : vector<8x32xf32>, vector<32x128xf32>, vector<8x128xf32> -> vector<8x128xf32>
    %17 = arith.addf %16, %13 : vector<8x128xf32>
    %18 = vector.extract_strided_slice %17 {offsets = [0, 0], sizes = [8, 32], strides = [1, 1]} : vector<8x128xf32> to vector<8x32xf32>
    %19 = vector.extract_strided_slice %17 {offsets = [0, 32], sizes = [8, 32], strides = [1, 1]} : vector<8x128xf32> to vector<8x32xf32>
    %20 = vector.extract_strided_slice %17 {offsets = [0, 64], sizes = [8, 32], strides = [1, 1]} : vector<8x128xf32> to vector<8x32xf32>
    %21 = vector.extract_strided_slice %17 {offsets = [0, 96], sizes = [8, 32], strides = [1, 1]} : vector<8x128xf32> to vector<8x32xf32>
    %22 = vector.shape_cast %18 : vector<8x32xf32> to vector<8x1x32xf32>
    %23 = vector.broadcast %22 : vector<8x1x32xf32> to vector<8x8x32xf32>
    %24 = arith.addf %7, %23 : vector<8x8x32xf32>
    %25 = math.tanh %24 : vector<8x8x32xf32>
    %26 = vector.shape_cast %8 : vector<8x32xf32> to vector<8x1x32xf32>
    %27 = vector.broadcast %26 : vector<8x1x32xf32> to vector<8x8x32xf32>
    %28 = arith.mulf %25, %27 : vector<8x8x32xf32>
    %cst_21 = arith.constant dense<0.000000e+00> : vector<8x8xf32>
    %29 = vector.multi_reduction <add>, %28, %cst_21 [2] : vector<8x8x32xf32> to vector<8x8xf32>
    %cst_22 = arith.constant dense<0xFF800000> : vector<8xf32>
    %30 = vector.multi_reduction <maximumf>, %29, %cst_22 [1] : vector<8x8xf32> to vector<8xf32>
    %31 = vector.shape_cast %30 : vector<8xf32> to vector<8x1xf32>
    %32 = vector.broadcast %31 : vector<8x1xf32> to vector<8x8xf32>
    %33 = arith.subf %29, %32 : vector<8x8xf32>
    %34 = math.exp %33 : vector<8x8xf32>
    %cst_23 = arith.constant dense<0.000000e+00> : vector<8xf32>
    %35 = vector.multi_reduction <add>, %34, %cst_23 [1] : vector<8x8xf32> to vector<8xf32>
    %36 = vector.shape_cast %35 : vector<8xf32> to vector<8x1xf32>
    %37 = vector.broadcast %36 : vector<8x1xf32> to vector<8x8xf32>
    %38 = arith.divf %34, %37 : vector<8x8xf32>
    %39 = vector.shape_cast %38 : vector<8x8xf32> to vector<8x8x1xf32>
    %40 = vector.broadcast %39 : vector<8x8x1xf32> to vector<8x8x32xf32>
    %41 = arith.mulf %40, %6 : vector<8x8x32xf32>
    %cst_24 = arith.constant dense<0.000000e+00> : vector<8x32xf32>
    %42 = vector.multi_reduction <add>, %41, %cst_24 [1] : vector<8x8x32xf32> to vector<8x32xf32>
    %c0_25 = arith.constant 0 : index
    %c0_26 = arith.constant 0 : index
    %43 = vector.load %arg6[%c0_25, %c0_26] : memref<48x32xf32, #tpu.memory_space<vmem>>, vector<16x32xf32>
    %cst_27 = arith.constant dense<0.000000e+00> : vector<8x32xf32>
    %44 = tpu.matmul %4, %43, %cst_27 {dimension_numbers = #tpu.dot_dimension_numbers<[1], [0], [0], [1], [0, 0, 1, 1], [], []>} : vector<8x16xf32>, vector<16x32xf32>, vector<8x32xf32> -> vector<8x32xf32>
    %c16_28 = arith.constant 16 : index
    %c0_29 = arith.constant 0 : index
    %45 = vector.load %arg6[%c16_28, %c0_29] : memref<48x32xf32, #tpu.memory_space<vmem>>, vector<32x32xf32>
    %cst_30 = arith.constant dense<0.000000e+00> : vector<8x32xf32>
    %46 = tpu.matmul %42, %45, %cst_30 {dimension_numbers = #tpu.dot_dimension_numbers<[1], [0], [0], [1], [0, 0, 1, 1], [], []>} : vector<8x32xf32>, vector<32x32xf32>, vector<8x32xf32> -> vector<8x32xf32>
    %47 = arith.addf %44, %46 : vector<8x32xf32>
    %48 = arith.addf %47, %9 : vector<8x32xf32>
    %cst_31 = arith.constant dense<0.000000e+00> : vector<32xf32>
    %49 = vector.multi_reduction <add>, %48, %cst_31 [0] : vector<8x32xf32> to vector<32xf32>
    %50 = vector.shape_cast %49 : vector<32xf32> to vector<1x32xf32>
    %cst_32 = arith.constant 8.000000e+00 : f32
    %51 = vector.broadcast %cst_32 : f32 to vector<1x32xf32>
    %52 = arith.divf %50, %51 : vector<1x32xf32>
    %53 = vector.broadcast %52 : vector<1x32xf32> to vector<8x32xf32>
    %54 = arith.subf %48, %53 : vector<8x32xf32>
    %55 = vector.broadcast %52 : vector<1x32xf32> to vector<8x32xf32>
    %56 = arith.subf %48, %55 : vector<8x32xf32>
    %57 = arith.mulf %54, %56 : vector<8x32xf32>
    %cst_33 = arith.constant dense<0.000000e+00> : vector<32xf32>
    %58 = vector.multi_reduction <add>, %57, %cst_33 [0] : vector<8x32xf32> to vector<32xf32>
    %59 = vector.shape_cast %58 : vector<32xf32> to vector<1x32xf32>
    %cst_34 = arith.constant 8.000000e+00 : f32
    %60 = vector.broadcast %cst_34 : f32 to vector<1x32xf32>
    %61 = arith.divf %59, %60 : vector<1x32xf32>
    %62 = vector.broadcast %52 : vector<1x32xf32> to vector<8x32xf32>
    %63 = arith.subf %48, %62 : vector<8x32xf32>
    %cst_35 = arith.constant 9.99999974E-6 : f32
    %64 = vector.broadcast %cst_35 : f32 to vector<1x32xf32>
    %65 = arith.addf %61, %64 : vector<1x32xf32>
    %66 = math.rsqrt %65 : vector<1x32xf32>
    %67 = vector.broadcast %66 : vector<1x32xf32> to vector<8x32xf32>
    %68 = arith.mulf %63, %67 : vector<8x32xf32>
    %69 = arith.mulf %68, %10 : vector<8x32xf32>
    %70 = arith.addf %69, %11 : vector<8x32xf32>
    %cst_36 = arith.constant 0.000000e+00 : f32
    %71 = vector.broadcast %cst_36 : f32 to vector<8x32xf32>
    %72 = arith.maximumf %70, %71 : vector<8x32xf32>
    %c0_37 = arith.constant 0 : index
    %c0_38 = arith.constant 0 : index
    %73 = vector.load %arg7[%c0_37, %c0_38] : memref<32x128xf32, #tpu.memory_space<vmem>>, vector<32x128xf32>
    %cst_39 = arith.constant dense<0.000000e+00> : vector<8x128xf32>
    %74 = tpu.matmul %72, %73, %cst_39 {dimension_numbers = #tpu.dot_dimension_numbers<[1], [0], [0], [1], [0, 0, 1, 1], [], []>} : vector<8x32xf32>, vector<32x128xf32>, vector<8x128xf32> -> vector<8x128xf32>
    %75 = vector.extract_strided_slice %74 {offsets = [0, 0], sizes = [8, 32], strides = [1, 1]} : vector<8x128xf32> to vector<8x32xf32>
    %76 = vector.extract_strided_slice %12 {offsets = [0, 0], sizes = [8, 32], strides = [1, 1]} : vector<8x96xf32> to vector<8x32xf32>
    %77 = arith.addf %75, %76 : vector<8x32xf32>
    %78 = arith.addf %77, %19 : vector<8x32xf32>
    %79 = arith.negf %78 : vector<8x32xf32>
    %80 = math.exp %79 : vector<8x32xf32>
    %cst_40 = arith.constant 1.000000e+00 : f32
    %81 = vector.broadcast %cst_40 : f32 to vector<8x32xf32>
    %82 = arith.addf %81, %80 : vector<8x32xf32>
    %83 = arith.divf %81, %82 : vector<8x32xf32>
    %84 = vector.extract_strided_slice %74 {offsets = [0, 32], sizes = [8, 32], strides = [1, 1]} : vector<8x128xf32> to vector<8x32xf32>
    %85 = vector.extract_strided_slice %12 {offsets = [0, 32], sizes = [8, 32], strides = [1, 1]} : vector<8x96xf32> to vector<8x32xf32>
    %86 = arith.addf %84, %85 : vector<8x32xf32>
    %87 = arith.addf %86, %20 : vector<8x32xf32>
    %88 = arith.negf %87 : vector<8x32xf32>
    %89 = math.exp %88 : vector<8x32xf32>
    %cst_41 = arith.constant 1.000000e+00 : f32
    %90 = vector.broadcast %cst_41 : f32 to vector<8x32xf32>
    %91 = arith.addf %90, %89 : vector<8x32xf32>
    %92 = arith.divf %90, %91 : vector<8x32xf32>
    %93 = vector.extract_strided_slice %74 {offsets = [0, 64], sizes = [8, 32], strides = [1, 1]} : vector<8x128xf32> to vector<8x32xf32>
    %94 = vector.extract_strided_slice %12 {offsets = [0, 64], sizes = [8, 32], strides = [1, 1]} : vector<8x96xf32> to vector<8x32xf32>
    %95 = arith.addf %93, %94 : vector<8x32xf32>
    %96 = arith.mulf %83, %21 : vector<8x32xf32>
    %97 = arith.addf %95, %96 : vector<8x32xf32>
    %98 = math.tanh %97 : vector<8x32xf32>
    %cst_42 = arith.constant 1.000000e+00 : f32
    %99 = vector.broadcast %cst_42 : f32 to vector<8x32xf32>
    %100 = arith.subf %99, %92 : vector<8x32xf32>
    %101 = arith.mulf %100, %98 : vector<8x32xf32>
    %102 = arith.mulf %92, %5 : vector<8x32xf32>
    %103 = arith.addf %101, %102 : vector<8x32xf32>
    %c0_43 = arith.constant 0 : index
    %c0_44 = arith.constant 0 : index
    %104 = vector.load %arg8[%c0_43, %c0_44] : memref<32x128xf32, #tpu.memory_space<vmem>>, vector<32x128xf32>
    %cst_45 = arith.constant dense<0.000000e+00> : vector<8x128xf32>
    %105 = tpu.matmul %103, %104, %cst_45 {dimension_numbers = #tpu.dot_dimension_numbers<[1], [0], [0], [1], [0, 0, 1, 1], [], []>} : vector<8x32xf32>, vector<32x128xf32>, vector<8x128xf32> -> vector<8x128xf32>
    %106 = vector.extract_strided_slice %105 {offsets = [0, 0], sizes = [8, 16], strides = [1, 1]} : vector<8x128xf32> to vector<8x16xf32>
    %107 = arith.addf %106, %14 : vector<8x16xf32>
    %c0_46 = arith.constant 0 : index
    %c0_47 = arith.constant 0 : index
    %108 = vector.load %arg13[%c0_46, %c0_47] : memref<8x32xf32, #tpu.memory_space<vmem>>, vector<8x32xf32>
    tpu.vector_store %arg13[%c0_46, %c0_47], %103 {strides = array<i32>} : memref<8x32xf32, #tpu.memory_space<vmem>>, vector<8x32xf32>,
    %c0_48 = arith.constant 0 : index
    %c0_49 = arith.constant 0 : index
    %c0_50 = arith.constant 0 : index
    %109 = vector.load %arg10[%c0_48, %c0_49, %c0_50] : memref<1x8x16xf32, #tpu.memory_space<vmem>>, vector<1x8x16xf32>
    %110 = vector.shape_cast %109 : vector<1x8x16xf32> to vector<8x16xf32>
    %111 = vector.shape_cast %107 : vector<8x16xf32> to vector<1x8x16xf32>
    tpu.vector_store %arg10[%c0_48, %c0_49, %c0_50], %111 {strides = array<i32>} : memref<1x8x16xf32, #tpu.memory_space<vmem>>, vector<1x8x16xf32>,
    %c0_51 = arith.constant 0 : index
    %c0_52 = arith.constant 0 : index
    %c0_53 = arith.constant 0 : index
    %112 = vector.load %arg11[%c0_51, %c0_52, %c0_53] : memref<1x8x32xf32, #tpu.memory_space<vmem>>, vector<1x8x32xf32>
    %113 = vector.shape_cast %112 : vector<1x8x32xf32> to vector<8x32xf32>
    %114 = vector.shape_cast %103 : vector<8x32xf32> to vector<1x8x32xf32>
    tpu.vector_store %arg11[%c0_51, %c0_52, %c0_53], %114 {strides = array<i32>} : memref<1x8x32xf32, #tpu.memory_space<vmem>>, vector<1x8x32xf32>,
    %c0_54 = arith.constant 0 : index
    %c0_55 = arith.constant 0 : index
    %c0_56 = arith.constant 0 : index
    %115 = vector.load %arg12[%c0_54, %c0_55, %c0_56] : memref<1x8x8xf32, #tpu.memory_space<vmem>>, vector<1x8x8xf32>
    %116 = vector.shape_cast %115 : vector<1x8x8xf32> to vector<8x8xf32>
    %117 = vector.shape_cast %38 : vector<8x8xf32> to vector<1x8x8xf32>
    tpu.vector_store %arg12[%c0_54, %c0_55, %c0_56], %117 {strides = array<i32>} : memref<1x8x8xf32, #tpu.memory_space<vmem>>, vector<1x8x8xf32>,
    return
  }
  func.func @transform_0(%arg0: i32) -> (i32, i32, i32) {
    %c0_i32 = arith.constant 0 : i32
    %c0_i32_0 = arith.constant 0 : i32
    %c0_i32_1 = arith.constant 0 : i32
    return %arg0, %c0_i32, %c0_i32_0 : i32, i32, i32
  }
  func.func @transform_1(%arg0: i32) -> (i32, i32) {
    %c0_i32 = arith.constant 0 : i32
    %c0_i32_0 = arith.constant 0 : i32
    %c0_i32_1 = arith.constant 0 : i32
    return %c0_i32, %c0_i32_0 : i32, i32
  }
  func.func @transform_2(%arg0: i32) -> (i32, i32, i32) {
    %c0_i32 = arith.constant 0 : i32
    %c0_i32_0 = arith.constant 0 : i32
    %c0_i32_1 = arith.constant 0 : i32
    %c0_i32_2 = arith.constant 0 : i32
    return %c0_i32, %c0_i32_0, %c0_i32_1 : i32, i32, i32
  }
  func.func @transform_3(%arg0: i32) -> (i32, i32, i32) {
    %c0_i32 = arith.constant 0 : i32
    %c0_i32_0 = arith.constant 0 : i32
    %c0_i32_1 = arith.constant 0 : i32
    %c0_i32_2 = arith.constant 0 : i32
    return %c0_i32, %c0_i32_0, %c0_i32_1 : i32, i32, i32
  }
  func.func @transform_4(%arg0: i32) -> (i32, i32) {
    %c0_i32 = arith.constant 0 : i32
    %c0_i32_0 = arith.constant 0 : i32
    %c0_i32_1 = arith.constant 0 : i32
    return %c0_i32, %c0_i32_0 : i32, i32
  }
  func.func @transform_5(%arg0: i32) -> (i32, i32) {
    %c0_i32 = arith.constant 0 : i32
    %c0_i32_0 = arith.constant 0 : i32
    %c0_i32_1 = arith.constant 0 : i32
    return %c0_i32, %c0_i32_0 : i32, i32
  }
  func.func @transform_6(%arg0: i32) -> (i32, i32) {
    %c0_i32 = arith.constant 0 : i32
    %c0_i32_0 = arith.constant 0 : i32
    %c0_i32_1 = arith.constant 0 : i32
    return %c0_i32, %c0_i32_0 : i32, i32
  }
  func.func @transform_7(%arg0: i32) -> (i32, i32) {
    %c0_i32 = arith.constant 0 : i32
    %c0_i32_0 = arith.constant 0 : i32
    %c0_i32_1 = arith.constant 0 : i32
    return %c0_i32, %c0_i32_0 : i32, i32
  }
  func.func @transform_8(%arg0: i32) -> (i32, i32) {
    %c0_i32 = arith.constant 0 : i32
    %c0_i32_0 = arith.constant 0 : i32
    %c0_i32_1 = arith.constant 0 : i32
    return %c0_i32, %c0_i32_0 : i32, i32
  }
  func.func @transform_9(%arg0: i32) -> (i32, i32, i32) {
    %c0_i32 = arith.constant 0 : i32
    %c0_i32_0 = arith.constant 0 : i32
    %c0_i32_1 = arith.constant 0 : i32
    return %arg0, %c0_i32, %c0_i32_0 : i32, i32, i32
  }
  func.func @transform_10(%arg0: i32) -> (i32, i32, i32) {
    %c0_i32 = arith.constant 0 : i32
    %c0_i32_0 = arith.constant 0 : i32
    %c0_i32_1 = arith.constant 0 : i32
    return %arg0, %c0_i32, %c0_i32_0 : i32, i32, i32
  }
  func.func @transform_11(%arg0: i32) -> (i32, i32, i32) {
    %c0_i32 = arith.constant 0 : i32
    %c0_i32_0 = arith.constant 0 : i32
    %c0_i32_1 = arith.constant 0 : i32
    return %arg0, %c0_i32, %c0_i32_0 : i32, i32, i32
  }
}

</mosaic_0001>

<llo_original>
// kernel: tpu_custom_call.1
$region0: #{tpu_custom_call.1}
  #allocation0 [shape = 'u32[]', space=smem, size = 0x4, offset = 0x4, fixed_abs, tag = 'smem constant byte address 0x4 - core index']
  #allocation1 [shape = 'u32[144,128]{1,0:T(1,128)}', space=vmem, size = 0x12000, scoped, tag = 'internal scratch']
  #allocation2 [shape = 'f32[8,32]{1,0:T(8,128)}', space=vmem, size = 0x1000, scoped, tag = 'scratch operand']
  %s0 = inlined_call_operand.hbm [shape: f32[4,8,16], index: 0, kind: input, shape index: {}]
  %s1 = inlined_call_operand.hbm [shape: f32[8,32], index: 1, kind: input, shape index: {}]
  %s2 = inlined_call_operand.vmem [shape: f32[8,8,32], index: 2, kind: input, shape index: {}]
  %s3 = inlined_call_operand.hbm [shape: f32[8,8,32], index: 3, kind: input, shape index: {}]
  %s4 = inlined_call_operand.hbm [shape: f32[32,128], index: 4, kind: input, shape index: {}]
  %s5 = inlined_call_operand.vmem [shape: f32[48,32], index: 5, kind: input, shape index: {}]
  %s6 = inlined_call_operand.vmem [shape: f32[32,128], index: 6, kind: input, shape index: {}]
  %s7 = inlined_call_operand.hbm [shape: f32[32,128], index: 7, kind: input, shape index: {}]
  %s8 = inlined_call_operand.hbm [shape: f32[56,128], index: 8, kind: input, shape index: {}]
  %s9 = inlined_call_operand.hbm [shape: f32[4,8,16], index: 9, kind: output, shape index: {0}]
  %s10 = inlined_call_operand.hbm [shape: f32[4,8,32], index: 10, kind: output, shape index: {1}]
  %s11 = inlined_call_operand.hbm [shape: f32[4,8,8], index: 11, kind: output, shape index: {2}]
  %12 = xla_tuple %s9, %s10, %s11
  %s13 = sld [smem:[#allocation0]]
  $region113: #{tpu_custom_call.1} parent=0
    _
  %s15 = ssub.s32 1, %s13
  %s16 = scalar_select 0, %s15, %s13
  $region1: #{tpu_custom_call.1} parent=0
    #allocation3 [shape = 'u8[8192]{0}', space=vmem, size = 0x2000, scoped, tag = 'input window, operand 0']
    #allocation4 [shape = 's32[2]{0}', space=sflag, size = 0x8, scoped, tag = 'scoped memory for tpu_custom_call.1']
    #allocation5 [shape = 's32[2]{0}', space=sflag, size = 0x8, scoped, tag = 'scoped memory for tpu_custom_call.1']
    #allocation6 [shape = 'u8[4096]{0}', space=vmem, size = 0x1000, scoped, tag = 'input window, operand 1, single buffered']
    #allocation7 [shape = 's32[1]{0}', space=sflag, size = 0x4, scoped, tag = 'scoped memory for tpu_custom_call.1']
    #allocation8 [shape = 'u8[32768]{0}', space=vmem, size = 0x8000, scoped, tag = 'input window, operand 3, single buffered']
    #allocation9 [shape = 'u8[16384]{0}', space=vmem, size = 0x4000, scoped, tag = 'input window, operand 4, single buffered']
    #allocation10 [shape = 's32[1]{0}', space=sflag, size = 0x4, scoped, tag = 'scoped memory for tpu_custom_call.1']
    #allocation11 [shape = 'u8[16384]{0}', space=vmem, size = 0x4000, scoped, tag = 'input window, operand 7, single buffered']
    #allocation12 [shape = 'u8[28672]{0}', space=vmem, size = 0x7000, scoped, tag = 'input window, operand 8, single buffered']
    #allocation13 [shape = 's32[1]{0}', space=sflag, size = 0x4, scoped, tag = 'scoped memory for tpu_custom_call.1']
    #allocation14 [shape = 'u8[8192]{0}', space=vmem, size = 0x2000, scoped, tag = 'output window, operand 0']
    #allocation15 [shape = 'u8[8192]{0}', space=vmem, size = 0x2000, scoped, tag = 'output window, operand 1']
    #allocation16 [shape = 's32[2]{0}', space=sflag, size = 0x8, scoped, tag = 'scoped memory for tpu_custom_call.1']
    #allocation17 [shape = 'u8[8192]{0}', space=vmem, size = 0x2000, scoped, tag = 'output window, operand 2']
    %17 = vsyncpa [#allocation4], 0
    %s18 = scalar_lea.sflag [#allocation4], 1
    %19 = vsyncpa %s18, 0
    %20 = vsyncpa [#allocation7], 0
    %21 = vsyncpa [#allocation10], 0
    %22 = vsyncpa [#allocation13], 0
    %23 = vsyncpa [#allocation5], 0
    %s24 = scalar_lea.sflag [#allocation5], 1
    %25 = vsyncpa %s24, 0
    %26 = vsyncpa [#allocation16], 0
    %s27 = scalar_lea.sflag [#allocation16], 1
    %28 = vsyncpa %s27, 0
    loop: start=0, step=1, limit=6
    $region2: #{tpu_custom_call.1} parent=1 // loop_pre_header
      _
    $region3: #{tpu_custom_call.1} parent=1 // loop_header
      %s30 = sphi 0, %s34
      %p31 = scmp.ge.s32.totalorder %s30, 6
      %s40 = sphi 0, %s42
      %s43 = sphi 0, %s40
      %s44 = sphi 0, %s43
      %s60 = sphi 0, %s44
      %s64 = sphi 0, %s64
      %s66 = sphi 0, %s64
      %s67 = sphi 0, %s66
      %s81 = sphi 0, %s67
      %s85 = sphi 0, %s85
      %s87 = sphi 0, %s85
      %s88 = sphi 0, %s87
      %s102 = sphi 0, %s88
      %s106 = sphi 0, %s106
      %s108 = sphi 0, %s106
      %s109 = sphi 0, %s108
      %s123 = sphi 0, %s109
      %s127 = sphi 0, %s127
      %s129 = sphi 0, %s127
      %s130 = sphi 0, %s129
      %s144 = sphi 0, %s130
      %s148 = sphi 0, %s148
      %s150 = sphi 0, %s148
      %s151 = sphi 0, %s150
      %s165 = sphi 0, %s151
      %s169 = sphi 0, %s169
      %s171 = sphi 0, %s169
      %s172 = sphi 0, %s171
      %s186 = sphi 0, %s172
      %s190 = sphi 0, %s190
      %s192 = sphi 0, %s190
      %s193 = sphi 0, %s192
      %s207 = sphi 0, %s193
      %s211 = sphi 0, %s211
      %s213 = sphi 0, %s211
      %s214 = sphi 0, %s213
      %s228 = sphi 0, %s214
      %s234 = sphi 0, %s236
      %s237 = sphi 0, %s234
      %s238 = sphi 0, %s237
      %s254 = sphi 0, %s238
      %s260 = sphi 0, %s262
      %s263 = sphi 0, %s260
      %s264 = sphi 0, %s263
      %s280 = sphi 0, %s264
      %s286 = sphi 0, %s288
      %s289 = sphi 0, %s286
      %s290 = sphi 0, %s289
      %s306 = sphi 0, %s290
    $region4: #{tpu_custom_call.1} parent=1 // loop_header_branch
      %33 = sbr.rel (%p31) target = $region8
    $region5: #{tpu_custom_call.1} parent=1 // loop_body
      %s35 = ssub.s32 %s30, 1
      %s36 = ssub.s32 %s30, 2
      %s37 = sadd.s32 %s30, 1
      %s38 = ssub.s32 %s30, %s37
      %p39 = scmp.eq.s32.totalorder %s38, 0
      %s41 = sadd.s32 %s40, 1
      %s42 = scalar_select %p39, %s40, %s41
      %p45 = pneg %p39
      %p46 = scmp.eq.s32.totalorder %s30, 3
      %p47 = por %p45, %p46
      %p48 = scmp.ne.s32.totalorder %s40, %s43
      %p49 = scmp.eq.s32.totalorder %s30, 0
      %p50 = por %p48, %p49
      %p51 = scmp.ne.s32.totalorder %s40, %s43
      %p52 = scmp.eq.s32.totalorder %s35, 3
      %p53 = por %p51, %p52
      %p54 = scmp.ne.s32.totalorder %s43, %s44
      %p55 = scmp.eq.s32.totalorder %s35, 0
      %p56 = por %p54, %p55
      %p57 = scmp.ne.s32.totalorder %s43, %s44
      %p58 = scmp.eq.s32.totalorder %s36, 3
      %p59 = por %p57, %p58
      %p61 = scmp.ne.s32.totalorder %s44, %s60
      %p62 = scmp.eq.s32.totalorder %s36, 0
      %p63 = por %p61, %p62
      %s65 = sadd.s32 %s64, 1
      %p68 = scmp.eq.s32.totalorder %s30, 3
      %p69 = scmp.ne.s32.totalorder %s64, %s66
      %p70 = scmp.eq.s32.totalorder %s30, 0
      %p71 = por %p69, %p70
      %p72 = scmp.ne.s32.totalorder %s64, %s66
      %p73 = scmp.eq.s32.totalorder %s35, 3
      %p74 = por %p72, %p73
      %p75 = scmp.ne.s32.totalorder %s66, %s67
      %p76 = scmp.eq.s32.totalorder %s35, 0
      %p77 = por %p75, %p76
      %p78 = scmp.ne.s32.totalorder %s66, %s67
      %p79 = scmp.eq.s32.totalorder %s36, 3
      %p80 = por %p78, %p79
      %p82 = scmp.ne.s32.totalorder %s67, %s81
      %p83 = scmp.eq.s32.totalorder %s36, 0
      %p84 = por %p82, %p83
      %s86 = sadd.s32 %s85, 1
      %p89 = scmp.eq.s32.totalorder %s30, 3
      %p90 = scmp.ne.s32.totalorder %s85, %s87
      %p91 = scmp.eq.s32.totalorder %s30, 0
      %p92 = por %p90, %p91
      %p93 = scmp.ne.s32.totalorder %s85, %s87
      %p94 = scmp.eq.s32.totalorder %s35, 3
      %p95 = por %p93, %p94
      %p96 = scmp.ne.s32.totalorder %s87, %s88
      %p97 = scmp.eq.s32.totalorder %s35, 0
      %p98 = por %p96, %p97
      %p99 = scmp.ne.s32.totalorder %s87, %s88
      %p100 = scmp.eq.s32.totalorder %s36, 3
      %p101 = por %p99, %p100
      %p103 = scmp.ne.s32.totalorder %s88, %s102
      %p104 = scmp.eq.s32.totalorder %s36, 0
      %p105 = por %p103, %p104
      %s107 = sadd.s32 %s106, 1
      %p110 = scmp.eq.s32.totalorder %s30, 3
      %p111 = scmp.ne.s32.totalorder %s106, %s108
      %p112 = scmp.eq.s32.totalorder %s30, 0
      %p113 = por %p111, %p112
      %p114 = scmp.ne.s32.totalorder %s106, %s108
      %p115 = scmp.eq.s32.totalorder %s35, 3
      %p116 = por %p114, %p115
      %p117 = scmp.ne.s32.totalorder %s108, %s109
      %p118 = scmp.eq.s32.totalorder %s35, 0
      %p119 = por %p117, %p118
      %p120 = scmp.ne.s32.totalorder %s108, %s109
      %p121 = scmp.eq.s32.totalorder %s36, 3
      %p122 = por %p120, %p121
      %p124 = scmp.ne.s32.totalorder %s109, %s123
      %p125 = scmp.eq.s32.totalorder %s36, 0
      %p126 = por %p124, %p125
      %s128 = sadd.s32 %s127, 1
      %p131 = scmp.eq.s32.totalorder %s30, 3
      %p132 = scmp.ne.s32.totalorder %s127, %s129
      %p133 = scmp.eq.s32.totalorder %s30, 0
      %p134 = por %p132, %p133
      %p135 = scmp.ne.s32.totalorder %s127, %s129
      %p136 = scmp.eq.s32.totalorder %s35, 3
      %p137 = por %p135, %p136
      %p138 = scmp.ne.s32.totalorder %s129, %s130
      %p139 = scmp.eq.s32.totalorder %s35, 0
      %p140 = por %p138, %p139
      %p141 = scmp.ne.s32.totalorder %s129, %s130
      %p142 = scmp.eq.s32.totalorder %s36, 3
      %p143 = por %p141, %p142
      %p145 = scmp.ne.s32.totalorder %s130, %s144
      %p146 = scmp.eq.s32.totalorder %s36, 0
      %p147 = por %p145, %p146
      %s149 = sadd.s32 %s148, 1
      %p152 = scmp.eq.s32.totalorder %s30, 3
      %p153 = scmp.ne.s32.totalorder %s148, %s150
      %p154 = scmp.eq.s32.totalorder %s30, 0
      %p155 = por %p153, %p154
      %p156 = scmp.ne.s32.totalorder %s148, %s150
      %p157 = scmp.eq.s32.totalorder %s35, 3
      %p158 = por %p156, %p157
      %p159 = scmp.ne.s32.totalorder %s150, %s151
      %p160 = scmp.eq.s32.totalorder %s35, 0
      %p161 = por %p159, %p160
      %p162 = scmp.ne.s32.totalorder %s150, %s151
      %p163 = scmp.eq.s32.totalorder %s36, 3
      %p164 = por %p162, %p163
      %p166 = scmp.ne.s32.totalorder %s151, %s165
      %p167 = scmp.eq.s32.totalorder %s36, 0
      %p168 = por %p166, %p167
      %s170 = sadd.s32 %s169, 1
      %p173 = scmp.eq.s32.totalorder %s30, 3
      %p174 = scmp.ne.s32.totalorder %s169, %s171
      %p175 = scmp.eq.s32.totalorder %s30, 0
      %p176 = por %p174, %p175
      %p177 = scmp.ne.s32.totalorder %s169, %s171
      %p178 = scmp.eq.s32.totalorder %s35, 3
      %p179 = por %p177, %p178
      %p180 = scmp.ne.s32.totalorder %s171, %s172
      %p181 = scmp.eq.s32.totalorder %s35, 0
      %p182 = por %p180, %p181
      %p183 = scmp.ne.s32.totalorder %s171, %s172
      %p184 = scmp.eq.s32.totalorder %s36, 3
      %p185 = por %p183, %p184
      %p187 = scmp.ne.s32.totalorder %s172, %s186
      %p188 = scmp.eq.s32.totalorder %s36, 0
      %p189 = por %p187, %p188
      %s191 = sadd.s32 %s190, 1
      %p194 = scmp.eq.s32.totalorder %s30, 3
      %p195 = scmp.ne.s32.totalorder %s190, %s192
      %p196 = scmp.eq.s32.totalorder %s30, 0
      %p197 = por %p195, %p196
      %p198 = scmp.ne.s32.totalorder %s190, %s192
      %p199 = scmp.eq.s32.totalorder %s35, 3
      %p200 = por %p198, %p199
      %p201 = scmp.ne.s32.totalorder %s192, %s193
      %p202 = scmp.eq.s32.totalorder %s35, 0
      %p203 = por %p201, %p202
      %p204 = scmp.ne.s32.totalorder %s192, %s193
      %p205 = scmp.eq.s32.totalorder %s36, 3
      %p206 = por %p204, %p205
      %p208 = scmp.ne.s32.totalorder %s193, %s207
      %p209 = scmp.eq.s32.totalorder %s36, 0
      %p210 = por %p208, %p209
      %s212 = sadd.s32 %s211, 1
      %p215 = scmp.eq.s32.totalorder %s30, 3
      %p216 = scmp.ne.s32.totalorder %s211, %s213
      %p217 = scmp.eq.s32.totalorder %s30, 0
      %p218 = por %p216, %p217
      %p219 = scmp.ne.s32.totalorder %s211, %s213
      %p220 = scmp.eq.s32.totalorder %s35, 3
      %p221 = por %p219, %p220
      %p222 = scmp.ne.s32.totalorder %s213, %s214
      %p223 = scmp.eq.s32.totalorder %s35, 0
      %p224 = por %p222, %p223
      %p225 = scmp.ne.s32.totalorder %s213, %s214
      %p226 = scmp.eq.s32.totalorder %s36, 3
      %p227 = por %p225, %p226
      %p229 = scmp.ne.s32.totalorder %s214, %s228
      %p230 = scmp.eq.s32.totalorder %s36, 0
      %p231 = por %p229, %p230
      %s232 = ssub.s32 %s30, %s37
      %p233 = scmp.eq.s32.totalorder %s232, 0
      %s235 = sadd.s32 %s234, 1
      %s236 = scalar_select %p233, %s234, %s235
      %p239 = pneg %p233
      %p240 = scmp.eq.s32.totalorder %s30, 3
      %p241 = por %p239, %p240
      %p242 = scmp.ne.s32.totalorder %s234, %s237
      %p243 = scmp.eq.s32.totalorder %s30, 0
      %p244 = por %p242, %p243
      %p245 = scmp.ne.s32.totalorder %s234, %s237
      %p246 = scmp.eq.s32.totalorder %s35, 3
      %p247 = por %p245, %p246
      %p248 = scmp.ne.s32.totalorder %s237, %s238
      %p249 = scmp.eq.s32.totalorder %s35, 0
      %p250 = por %p248, %p249
      %p251 = scmp.ne.s32.totalorder %s237, %s238
      %p252 = scmp.eq.s32.totalorder %s36, 3
      %p253 = por %p251, %p252
      %p255 = scmp.ne.s32.totalorder %s238, %s254
      %p256 = scmp.eq.s32.totalorder %s36, 0
      %p257 = por %p255, %p256
      %s258 = ssub.s32 %s30, %s37
      %p259 = scmp.eq.s32.totalorder %s258, 0
      %s261 = sadd.s32 %s260, 1
      %s262 = scalar_select %p259, %s260, %s261
      %p265 = pneg %p259
      %p266 = scmp.eq.s32.totalorder %s30, 3
      %p267 = por %p265, %p266
      %p268 = scmp.ne.s32.totalorder %s260, %s263
      %p269 = scmp.eq.s32.totalorder %s30, 0
      %p270 = por %p268, %p269
      %p271 = scmp.ne.s32.totalorder %s260, %s263
      %p272 = scmp.eq.s32.totalorder %s35, 3
      %p273 = por %p271, %p272
      %p274 = scmp.ne.s32.totalorder %s263, %s264
      %p275 = scmp.eq.s32.totalorder %s35, 0
      %p276 = por %p274, %p275
      %p277 = scmp.ne.s32.totalorder %s263, %s264
      %p278 = scmp.eq.s32.totalorder %s36, 3
      %p279 = por %p277, %p278
      %p281 = scmp.ne.s32.totalorder %s264, %s280
      %p282 = scmp.eq.s32.totalorder %s36, 0
      %p283 = por %p281, %p282
      %s284 = ssub.s32 %s30, %s37
      %p285 = scmp.eq.s32.totalorder %s284, 0
      %s287 = sadd.s32 %s286, 1
      %s288 = scalar_select %p285, %s286, %s287
      %p291 = pneg %p285
      %p292 = scmp.eq.s32.totalorder %s30, 3
      %p293 = por %p291, %p292
      %p294 = scmp.ne.s32.totalorder %s286, %s289
      %p295 = scmp.eq.s32.totalorder %s30, 0
      %p296 = por %p294, %p295
      %p297 = scmp.ne.s32.totalorder %s286, %s289
      %p298 = scmp.eq.s32.totalorder %s35, 3
      %p299 = por %p297, %p298
      %p300 = scmp.ne.s32.totalorder %s289, %s290
      %p301 = scmp.eq.s32.totalorder %s35, 0
      %p302 = por %p300, %p301
      %p303 = scmp.ne.s32.totalorder %s289, %s290
      %p304 = scmp.eq.s32.totalorder %s36, 3
      %p305 = por %p303, %p304
      %p307 = scmp.ne.s32.totalorder %s290, %s306
      %p308 = scmp.eq.s32.totalorder %s36, 0
      %p309 = por %p307, %p308
      %p310 = scmp.le.s32.totalorder 1, %s30
      %p311 = scmp.lt.s32.totalorder %s30, 5
      %p312 = pnand %p310, %p311
      %p313 = pneg %p312
      // Predicated region
      $region9: #{tpu_custom_call.1} parent=5 // pred_check
        _
      $region10: #{tpu_custom_call.1} parent=5 // pred_check_branch
        %315 = sbr.rel (%p312) target = $region12
      $region11: #{tpu_custom_call.1} parent=5 // pred_region
        %s316 = ssub.s32 %s30, 1
        // Predicated region
        $region13: #{tpu_custom_call.1} parent=11 // pred_check
          %p317 = pneg %p77
        $region14: #{tpu_custom_call.1} parent=11 // pred_check_branch
          %319 = sbr.rel (%p317) target = $region16
        $region15: #{tpu_custom_call.1} parent=11 // pred_region
          %s321 = ssub.s32 128, 128
          %322 = vsyncadd [#allocation7], %s321
          %s324 = sshll.u32 [#allocation6], 4
          %s325 = int_to_ptr.vmem [resolvable:$true] %s324
          %327 = dma.hbm_to_vmem [thread:$0]  %s1, 128, %s325, [#allocation7]
        $region16: #{tpu_custom_call.1} parent=11 // pred_fallthru
          _
        // Predicated region
        $region17: #{tpu_custom_call.1} parent=11 // pred_check
          %p328 = pneg %p98
        $region18: #{tpu_custom_call.1} parent=11 // pred_check_branch
          %330 = sbr.rel (%p328) target = $region20
        $region19: #{tpu_custom_call.1} parent=11 // pred_region
          _
        $region20: #{tpu_custom_call.1} parent=11 // pred_fallthru
          _
        // Predicated region
        $region21: #{tpu_custom_call.1} parent=11 // pred_check
          %p331 = pneg %p119
        $region22: #{tpu_custom_call.1} parent=11 // pred_check_branch
          %333 = sbr.rel (%p331) target = $region24
        $region23: #{tpu_custom_call.1} parent=11 // pred_region
          %s335 = ssub.s32 1024, 1024
          %336 = vsyncadd [#allocation7], %s335
          %s337 = sshll.u32 [#allocation8], 4
          %s338 = int_to_ptr.vmem [resolvable:$true] %s337
          %343 = dma.hbm_to_vmem [thread:$0]  %s3, 1024, %s338, [#allocation7], 128, 128, 8
        $region24: #{tpu_custom_call.1} parent=11 // pred_fallthru
          _
        // Predicated region
        $region25: #{tpu_custom_call.1} parent=11 // pred_check
          %p344 = pneg %p140
        $region26: #{tpu_custom_call.1} parent=11 // pred_check_branch
          %346 = sbr.rel (%p344) target = $region28
        $region27: #{tpu_custom_call.1} parent=11 // pred_region
          %s348 = ssub.s32 512, 512
          %349 = vsyncadd [#allocation10], %s348
          %s350 = sshll.u32 [#allocation9], 4
          %s351 = int_to_ptr.vmem [resolvable:$true] %s350
          %356 = dma.hbm_to_vmem [thread:$0]  %s4, 512, %s351, [#allocation10], 128, 128, 8
        $region28: #{tpu_custom_call.1} parent=11 // pred_fallthru
          _
        // Predicated region
        $region29: #{tpu_custom_call.1} parent=11 // pred_check
          %p357 = pneg %p161
        $region30: #{tpu_custom_call.1} parent=11 // pred_check_branch
          %359 = sbr.rel (%p357) target = $region32
        $region31: #{tpu_custom_call.1} parent=11 // pred_region
          _
        $region32: #{tpu_custom_call.1} parent=11 // pred_fallthru
          _
        // Predicated region
        $region33: #{tpu_custom_call.1} parent=11 // pred_check
          %p360 = pneg %p182
        $region34: #{tpu_custom_call.1} parent=11 // pred_check_branch
          %362 = sbr.rel (%p360) target = $region36
        $region35: #{tpu_custom_call.1} parent=11 // pred_region
          _
        $region36: #{tpu_custom_call.1} parent=11 // pred_fallthru
          _
        // Predicated region
        $region37: #{tpu_custom_call.1} parent=11 // pred_check
          %p363 = pneg %p203
        $region38: #{tpu_custom_call.1} parent=11 // pred_check_branch
          %365 = sbr.rel (%p363) target = $region40
        $region39: #{tpu_custom_call.1} parent=11 // pred_region
          %s367 = ssub.s32 512, 512
          %368 = vsyncadd [#allocation10], %s367
          %s369 = sshll.u32 [#allocation11], 4
          %s370 = int_to_ptr.vmem [resolvable:$true] %s369
          %375 = dma.hbm_to_vmem [thread:$0]  %s7, 512, %s370, [#allocation10], 128, 128, 8
        $region40: #{tpu_custom_call.1} parent=11 // pred_fallthru
          _
        // Predicated region
        $region41: #{tpu_custom_call.1} parent=11 // pred_check
          %p376 = pneg %p224
        $region42: #{tpu_custom_call.1} parent=11 // pred_check_branch
          %378 = sbr.rel (%p376) target = $region44
        $region43: #{tpu_custom_call.1} parent=11 // pred_region
          %s380 = ssub.s32 896, 896
          %381 = vsyncadd [#allocation13], %s380
          %s382 = sshll.u32 [#allocation12], 4
          %s383 = int_to_ptr.vmem [resolvable:$true] %s382
          %388 = dma.hbm_to_vmem [thread:$0]  %s8, 896, %s383, [#allocation13], 128, 128, 8
        $region44: #{tpu_custom_call.1} parent=11 // pred_fallthru
          _
      $region12: #{tpu_custom_call.1} parent=5 // pred_fallthru
        _
      %p389 = scmp.lt.s32.totalorder %s30, 4
      // Predicated region
      $region45: #{tpu_custom_call.1} parent=5 // pred_check
        %p390 = pneg %p389
      $region46: #{tpu_custom_call.1} parent=5 // pred_check_branch
        %392 = sbr.rel (%p390) target = $region48
      $region47: #{tpu_custom_call.1} parent=5 // pred_region
        // Predicated region
        $region49: #{tpu_custom_call.1} parent=47 // pred_check
          %p393 = pneg %p50
        $region50: #{tpu_custom_call.1} parent=47 // pred_check_branch
          %395 = sbr.rel (%p393) target = $region52
        $region51: #{tpu_custom_call.1} parent=47 // pred_region
          %s396 = sand.u32 %s40, 1
          %s397 = scalar_lea.sflag [#allocation4], %s396
          %s398 = sand.u32 %s40, 1
          %s399 = smul.addr %s398, 8
          %s400 = scalar_lea.vmem [#allocation3], %s399
          %s402 = ssub.s32 128, 128
          %403 = vsyncadd %s397, %s402
          %s404 = smul.addr %s30, 128
          %s405 = scalar_lea.hbm %s0, %s404
          %s407 = sshll.u32 %s400, 4
          %s408 = int_to_ptr.vmem [resolvable:$true] %s407
          %410 = dma.hbm_to_vmem [thread:$0]  %s405, 128, %s408, %s397
        $region52: #{tpu_custom_call.1} parent=47 // pred_fallthru
          _
      $region48: #{tpu_custom_call.1} parent=5 // pred_fallthru
        _
      %p411 = scmp.le.s32.totalorder 1, %s30
      %p412 = scmp.lt.s32.totalorder %s30, 5
      %p413 = pnand %p411, %p412
      %p414 = pneg %p413
      // Predicated region
      $region53: #{tpu_custom_call.1} parent=5 // pred_check
        _
      $region54: #{tpu_custom_call.1} parent=5 // pred_check_branch
        %416 = sbr.rel (%p413) target = $region56
      $region55: #{tpu_custom_call.1} parent=5 // pred_region
        %s417 = ssub.s32 %s30, 1
        %s418 = sand.u32 %s43, 1
        %s419 = scalar_lea.sflag [#allocation4], %s418
        %s420 = sand.u32 %s43, 1
        %s421 = smul.addr %s420, 8
        %s422 = scalar_lea.vmem [#allocation3], %s421
        // Predicated region
        $region57: #{tpu_custom_call.1} parent=55 // pred_check
          %p423 = pneg %p56
        $region58: #{tpu_custom_call.1} parent=55 // pred_check_branch
          %425 = sbr.rel (%p423) target = $region60
        $region59: #{tpu_custom_call.1} parent=55 // pred_region
          %426 = dma.done %s419, 128
        $region60: #{tpu_custom_call.1} parent=55 // pred_fallthru
          _
        // Predicated region
        $region61: #{tpu_custom_call.1} parent=55 // pred_check
          %p427 = pneg %p77
        $region62: #{tpu_custom_call.1} parent=55 // pred_check_branch
          %429 = sbr.rel (%p427) target = $region64
        $region63: #{tpu_custom_call.1} parent=55 // pred_region
          %430 = dma.done [#allocation7], 128
        $region64: #{tpu_custom_call.1} parent=55 // pred_fallthru
          _
        // Predicated region
        $region65: #{tpu_custom_call.1} parent=55 // pred_check
          %p431 = pneg %p119
        $region66: #{tpu_custom_call.1} parent=55 // pred_check_branch
          %433 = sbr.rel (%p431) target = $region68
        $region67: #{tpu_custom_call.1} parent=55 // pred_region
          %434 = dma.done [#allocation7], 1024
        $region68: #{tpu_custom_call.1} parent=55 // pred_fallthru
          _
        // Predicated region
        $region69: #{tpu_custom_call.1} parent=55 // pred_check
          %p435 = pneg %p140
        $region70: #{tpu_custom_call.1} parent=55 // pred_check_branch
          %437 = sbr.rel (%p435) target = $region72
        $region71: #{tpu_custom_call.1} parent=55 // pred_region
          %438 = dma.done [#allocation10], 512
        $region72: #{tpu_custom_call.1} parent=55 // pred_fallthru
          _
        // Predicated region
        $region73: #{tpu_custom_call.1} parent=55 // pred_check
          %p439 = pneg %p203
        $region74: #{tpu_custom_call.1} parent=55 // pred_check_branch
          %441 = sbr.rel (%p439) target = $region76
        $region75: #{tpu_custom_call.1} parent=55 // pred_region
          %442 = dma.done [#allocation10], 512
        $region76: #{tpu_custom_call.1} parent=55 // pred_fallthru
          _
        // Predicated region
        $region77: #{tpu_custom_call.1} parent=55 // pred_check
          %p443 = pneg %p224
        $region78: #{tpu_custom_call.1} parent=55 // pred_check_branch
          %445 = sbr.rel (%p443) target = $region80
        $region79: #{tpu_custom_call.1} parent=55 // pred_region
          %446 = dma.done [#allocation13], 896
        $region80: #{tpu_custom_call.1} parent=55 // pred_fallthru
          _
        %s447 = sand.u32 %s43, 1
        %s448 = scalar_lea.sflag [#allocation4], %s447
        %s449 = sand.u32 %s43, 1
        %s450 = smul.addr %s449, 8
        %s451 = scalar_lea.vmem [#allocation3], %s450
        %p452 = pneg %p56
        %p453 = pneg %p53
        %p454 = pneg %p77
        %p455 = pneg %p74
        %p456 = pneg %p98
        %p457 = pneg %p95
        %p458 = pneg %p119
        %p459 = pneg %p116
        %p460 = pneg %p140
        %p461 = pneg %p137
        %p462 = pneg %p161
        %p463 = pneg %p158
        %p464 = pneg %p182
        %p465 = pneg %p179
        %p466 = pneg %p203
        %p467 = pneg %p200
        %p468 = pneg %p224
        %p469 = pneg %p221
        %p470 = pneg %p250
        %p471 = pneg %p247
        %s472 = sand.u32 %s237, 1
        %s473 = scalar_lea.sflag [#allocation5], %s472
        %s474 = sand.u32 %s237, 1
        %s475 = smul.addr %s474, 8
        %s476 = scalar_lea.vmem [#allocation14], %s475
        %p477 = pneg %p276
        %p478 = pneg %p273
        %s479 = sand.u32 %s35, 1
        %s480 = scalar_lea.sflag [#allocation16], %s479
        %s481 = sand.u32 %s263, 1
        %s482 = smul.addr %s481, 8
        %s483 = scalar_lea.vmem [#allocation15], %s482
        %p484 = pneg %p302
        %p485 = pneg %p299
        %s486 = sand.u32 %s35, 1
        %s487 = scalar_lea.sflag [#allocation16], %s486
        %s488 = sand.u32 %s289, 1
        %s489 = smul.addr %s488, 8
        %s490 = scalar_lea.vmem [#allocation17], %s489
        %p491 = scmp.eq.s32.totalorder %s35, 0
        // Predicated region
        $region81: #{tpu_custom_call.1} parent=55 // pred_check
          %p492 = pneg %p491
        $region82: #{tpu_custom_call.1} parent=55 // pred_check_branch
          %494 = sbr.rel (%p492) target = $region84
        $region83: #{tpu_custom_call.1} parent=55 // pred_region
          %v495 = vld [vmem:[#allocation6] sm:$0xff]
          %vm496 = vcmask 261120
          %497 = vst.msk [vmem:[#allocation2] sm:$0xff] %vm496, %v495
        $region84: #{tpu_custom_call.1} parent=55 // pred_fallthru
          _
        %v498 = vld [vmem:[%s422] sm:$0xff]
        %v499 = vld [vmem:[#allocation2] sm:$0xff]
        %v500 = vld [vmem:[%s2] sm:$0xff]
        %v501 = vld [vmem:[%s2 + $0x8] sm:$0xff]
        %v502 = vld [vmem:[%s2 + $0x10] sm:$0xff]
        %v503 = vld [vmem:[%s2 + $0x18] sm:$0xff]
        %v504 = vld [vmem:[%s2 + $0x20] sm:$0xff]
        %v505 = vld [vmem:[%s2 + $0x28] sm:$0xff]
        %v506 = vld [vmem:[%s2 + $0x30] sm:$0xff]
        %v507 = vld [vmem:[%s2 + $0x38] sm:$0xff]
        %v508 = vld [vmem:[#allocation8] sm:$0xff]
        %v509 = vld [vmem:[#allocation8 + $0x8] sm:$0xff]
        %v510 = vld [vmem:[#allocation8 + $0x10] sm:$0xff]
        %v511 = vld [vmem:[#allocation8 + $0x18] sm:$0xff]
        %v512 = vld [vmem:[#allocation8 + $0x20] sm:$0xff]
        %v513 = vld [vmem:[#allocation8 + $0x28] sm:$0xff]
        %v514 = vld [vmem:[#allocation8 + $0x30] sm:$0xff]
        %v515 = vld [vmem:[#allocation8 + $0x38] sm:$0xff]
        %v516 = vld [vmem:[#allocation12] sm:$0xff]
        %v517 = vld [vmem:[#allocation12 + $0x8] sm:$0xff]
        %v518 = vld [vmem:[#allocation12 + $0x10] sm:$0xff]
        %v519 = vld [vmem:[#allocation12 + $0x18] sm:$0xff]
        %v520 = vld [vmem:[#allocation12 + $0x20] sm:$0xff]
        %v521 = vld [vmem:[#allocation12 + $0x28] sm:$0xff]
        %v522 = vld [vmem:[#allocation12 + $0x30] sm:$0xff]
        %v523 = vld [vmem:[#allocation9] sm:$0xff]
        %v524 = vld [vmem:[#allocation9 + $0x8] sm:$0xff]
        %v525 = vld [vmem:[#allocation9 + $0x10] sm:$0xff]
        %v526 = vld [vmem:[#allocation9 + $0x18] sm:$0xff]
        %vm527 = vcmask 261120
        %v529 = vsel %vm527, %v499, 0
        %531 = vmatprep.subr.mxu0 0.0
        %532 = vmatpush1.msra.mxu0 %v523
        %533 = vmatprep.subr.mxu0 0.0
        %534 = vmatpush1.msra.mxu0 %v524
        %535 = vmatprep.subr.mxu0 0.0
        %536 = vmatpush1.msra.mxu0 %v525
        %537 = vmatprep.subr.mxu0 0.0
        %538 = vmatpush1.msra.mxu0 %v526
        %539 = vmatprep.subr.mxu0 0.0
        %540 = vmatpush1.msra.mxu0 0.0
        %541 = vmatprep.subr.mxu0 0.0
        %542 = vmatpush1.msra.mxu0 0.0
        %543 = vmatprep.subr.mxu0 0.0
        %544 = vmatpush1.msra.mxu0 0.0
        %545 = vmatprep.subr.mxu0 0.0
        %546 = vmatpush1.msra.mxu0 0.0
        %547 = vmatprep.subr.mxu0 0.0
        %548 = vmatpush1.msra.mxu0 0.0
        %549 = vmatprep.subr.mxu0 0.0
        %550 = vmatpush1.msra.mxu0 0.0
        %551 = vmatprep.subr.mxu0 0.0
        %552 = vmatpush1.msra.mxu0 0.0
        %553 = vmatprep.subr.mxu0 0.0
        %554 = vmatpush1.msra.mxu0 0.0
        %555 = vmatprep.subr.mxu0 0.0
        %556 = vmatpush1.msra.mxu0 0.0
        %557 = vmatprep.subr.mxu0 0.0
        %558 = vmatpush1.msra.mxu0 0.0
        %559 = vmatprep.subr.mxu0 0.0
        %560 = vmatpush1.msra.mxu0 0.0
        %561 = vmatprep.subr.mxu0 0.0
        %562 = vmatpush1.msra.mxu0 0.0
        %563 = vmatprep.subr.mxu0 0.0
        %564 = vmatpush1.msra.mxu0 0.0
        %565 = vmatprep.subr.mxu0 0.0
        %566 = vmatpush1.msra.mxu0 0.0
        %567 = vmatprep.subr.mxu0 0.0
        %568 = vmatpush1.msra.mxu0 0.0
        %569 = vmatprep.subr.mxu0 0.0
        %570 = vmatpush1.msra.mxu0 0.0
        %571 = vmatprep.subr.mxu0 0.0
        %572 = vmatpush1.msra.mxu0 0.0
        %573 = vmatprep.subr.mxu0 0.0
        %574 = vmatpush1.msra.mxu0 0.0
        %575 = vmatprep.subr.mxu0 0.0
        %576 = vmatpush1.msra.mxu0 0.0
        %577 = vmatprep.subr.mxu0 0.0
        %578 = vmatpush1.msra.mxu0 0.0
        %579 = vmatprep.subr.mxu0 0.0
        %580 = vmatpush1.msra.mxu0 0.0
        %581 = vmatprep.subr.mxu0 0.0
        %582 = vmatpush1.msra.mxu0 0.0
        %583 = vmatprep.subr.mxu0 0.0
        %584 = vmatpush1.msra.mxu0 0.0
        %585 = vmatprep.subr.mxu0 0.0
        %586 = vmatpush1.msra.mxu0 0.0
        %587 = vmatprep.subr.mxu0 0.0
        %588 = vmatpush1.msra.mxu0 0.0
        %589 = vmatprep.subr.mxu0 0.0
        %590 = vmatpush1.msra.mxu0 0.0
        %591 = vmatprep.subr.mxu0 0.0
        %592 = vmatpush1.msra.mxu0 0.0
        %593 = vmatprep.subr.mxu0 0.0
        %594 = vmatpush1.msra.mxu0 0.0
        %595 = vmatprep.mubr.f32.mxu0 0.0
        %596 = vmatmul.mubr.f32.gmra.mrb[0].mxu0 %v529
        %v597 = vpop.f32.mrb[0].mxu0
        %v598 = vadd.f32 %v521, %v597
        %v599 = vpop.f32.mrb[0].mxu0
        %600 = vdwg.mxu0
        %v602 = vcombine.high %v598, %v598
        %v604 = vunpack.c.l.s4 1966171168
        %v605 = vunpack.c.0.s8 %v604
        %v606 = vlaneseq
        %v607 = vshrl.u32 %v606, 7
        %v608 = vsub.s32 %v605, %v607
        %v609 = vrot.slane %v598, %v608
        %v611 = vunpack.c.l.s4 1966171168
        %v612 = vunpack.c.0.s8 %v611
        %v613 = vlaneseq
        %v614 = vshrl.u32 %v613, 7
        %v615 = vsub.s32 %v612, %v614
        %v616 = vrot.slane %v602, %v615
        %v617 = vcombine.high %v609, %v609
        %v618 = vcombine.high %v616, %v616
        %v620 = vunpack.c.l.s4 1966171168
        %v621 = vunpack.c.0.s8 %v620
        %v622 = vlaneseq
        %v623 = vshrl.u32 %v622, 7
        %v624 = vsub.s32 %v621, %v623
        %v625 = vrot.slane %v609, %v624
        %v627 = vunpack.c.l.s4 1966171168
        %v628 = vunpack.c.0.s8 %v627
        %v629 = vlaneseq
        %v630 = vshrl.u32 %v629, 7
        %v631 = vsub.s32 %v628, %v630
        %v632 = vrot.slane %v616, %v631
        %v634 = vunpack.c.l.s4 1966171168
        %v635 = vunpack.c.0.s8 %v634
        %v636 = vlaneseq
        %v637 = vshrl.u32 %v636, 7
        %v638 = vsub.s32 %v635, %v637
        %v639 = vrot.slane %v617, %v638
        %v641 = vunpack.c.l.s4 1966171168
        %v642 = vunpack.c.0.s8 %v641
        %v643 = vlaneseq
        %v644 = vshrl.u32 %v643, 7
        %v645 = vsub.s32 %v642, %v644
        %v646 = vrot.slane %v618, %v645
        %v647 = vcombine.high %v625, %v625
        %v648 = vcombine.high %v632, %v632
        %v649 = vcombine.high %v639, %v639
        %v650 = vcombine.high %v646, %v646
        %v651 = vlaneseq
        %v652 = vshrl.u32 %v651, 7
        %v653 = vsub.s32 0, %v652
        %v654 = vrot.slane %v625, %v653
        %v655 = vlaneseq
        %v656 = vshrl.u32 %v655, 7
        %v657 = vsub.s32 0, %v656
        %v658 = vrot.slane %v639, %v657
        %v659 = vlaneseq
        %v660 = vshrl.u32 %v659, 7
        %v661 = vsub.s32 0, %v660
        %v662 = vrot.slane %v647, %v661
        %v663 = vlaneseq
        %v664 = vshrl.u32 %v663, 7
        %v665 = vsub.s32 0, %v664
        %v666 = vrot.slane %v649, %v665
        %v667 = vlaneseq
        %v668 = vshrl.u32 %v667, 7
        %v669 = vsub.s32 0, %v668
        %v670 = vrot.slane %v632, %v669
        %v671 = vlaneseq
        %v672 = vshrl.u32 %v671, 7
        %v673 = vsub.s32 0, %v672
        %v674 = vrot.slane %v646, %v673
        %v675 = vlaneseq
        %v676 = vshrl.u32 %v675, 7
        %v677 = vsub.s32 0, %v676
        %v678 = vrot.slane %v648, %v677
        %v679 = vlaneseq
        %v680 = vshrl.u32 %v679, 7
        %v681 = vsub.s32 0, %v680
        %v682 = vrot.slane %v650, %v681
        %v691 = vadd.f32 %v508, %v654
        %v692 = vadd.f32 %v509, %v658
        %v693 = vadd.f32 %v510, %v662
        %v694 = vadd.f32 %v511, %v666
        %v695 = vadd.f32 %v512, %v670
        %v696 = vadd.f32 %v513, %v674
        %v697 = vadd.f32 %v514, %v678
        %v698 = vadd.f32 %v515, %v682
        %v699 = vtanh.pop %v691
        %v700 = vtanh.pop %v692
        %v701 = vtanh.pop %v693
        %v702 = vtanh.pop %v694
        %v703 = vtanh.pop %v695
        %v704 = vtanh.pop %v696
        %v705 = vtanh.pop %v697
        %v706 = vtanh.pop %v698
        %v708 = vcombine.high %v516, %v516
        %v710 = vunpack.c.l.s4 1966171168
        %v711 = vunpack.c.0.s8 %v710
        %v712 = vlaneseq
        %v713 = vshrl.u32 %v712, 7
        %v714 = vsub.s32 %v711, %v713
        %v715 = vrot.slane %v516, %v714
        %v717 = vunpack.c.l.s4 1966171168
        %v718 = vunpack.c.0.s8 %v717
        %v719 = vlaneseq
        %v720 = vshrl.u32 %v719, 7
        %v721 = vsub.s32 %v718, %v720
        %v722 = vrot.slane %v708, %v721
        %v723 = vcombine.high %v715, %v715
        %v724 = vcombine.high %v722, %v722
        %v726 = vunpack.c.l.s4 1966171168
        %v727 = vunpack.c.0.s8 %v726
        %v728 = vlaneseq
        %v729 = vshrl.u32 %v728, 7
        %v730 = vsub.s32 %v727, %v729
        %v731 = vrot.slane %v715, %v730
        %v733 = vunpack.c.l.s4 1966171168
        %v734 = vunpack.c.0.s8 %v733
        %v735 = vlaneseq
        %v736 = vshrl.u32 %v735, 7
        %v737 = vsub.s32 %v734, %v736
        %v738 = vrot.slane %v722, %v737
        %v740 = vunpack.c.l.s4 1966171168
        %v741 = vunpack.c.0.s8 %v740
        %v742 = vlaneseq
        %v743 = vshrl.u32 %v742, 7
        %v744 = vsub.s32 %v741, %v743
        %v745 = vrot.slane %v723, %v744
        %v747 = vunpack.c.l.s4 1966171168
        %v748 = vunpack.c.0.s8 %v747
        %v749 = vlaneseq
        %v750 = vshrl.u32 %v749, 7
        %v751 = vsub.s32 %v748, %v750
        %v752 = vrot.slane %v724, %v751
        %v753 = vcombine.high %v731, %v731
        %v754 = vcombine.high %v738, %v738
        %v755 = vcombine.high %v745, %v745
        %v756 = vcombine.high %v752, %v752
        %v757 = vlaneseq
        %v758 = vshrl.u32 %v757, 7
        %v759 = vsub.s32 0, %v758
        %v760 = vrot.slane %v731, %v759
        %v761 = vlaneseq
        %v762 = vshrl.u32 %v761, 7
        %v763 = vsub.s32 0, %v762
        %v764 = vrot.slane %v745, %v763
        %v765 = vlaneseq
        %v766 = vshrl.u32 %v765, 7
        %v767 = vsub.s32 0, %v766
        %v768 = vrot.slane %v753, %v767
        %v769 = vlaneseq
        %v770 = vshrl.u32 %v769, 7
        %v771 = vsub.s32 0, %v770
        %v772 = vrot.slane %v755, %v771
        %v773 = vlaneseq
        %v774 = vshrl.u32 %v773, 7
        %v775 = vsub.s32 0, %v774
        %v776 = vrot.slane %v738, %v775
        %v777 = vlaneseq
        %v778 = vshrl.u32 %v777, 7
        %v779 = vsub.s32 0, %v778
        %v780 = vrot.slane %v752, %v779
        %v781 = vlaneseq
        %v782 = vshrl.u32 %v781, 7
        %v783 = vsub.s32 0, %v782
        %v784 = vrot.slane %v754, %v783
        %v785 = vlaneseq
        %v786 = vshrl.u32 %v785, 7
        %v787 = vsub.s32 0, %v786
        %v788 = vrot.slane %v756, %v787
        %v797 = vmul.f32 %v699, %v760
        %v798 = vmul.f32 %v700, %v764
        %v799 = vmul.f32 %v701, %v768
        %v800 = vmul.f32 %v702, %v772
        %v801 = vmul.f32 %v703, %v776
        %v802 = vmul.f32 %v704, %v780
        %v803 = vmul.f32 %v705, %v784
        %v804 = vmul.f32 %v706, %v788
        %v805 = vsel %vm527, %v797, 0.0
        %806 = vadd.xlane.f32.xlu0 %v805
        %v807 = vpop.xlane.xlu0 %806
        %v808 = vsel %vm527, %v798, 0.0
        %809 = vadd.xlane.f32.xlu0 %v808
        %v810 = vpop.xlane.xlu0 %809
        %v811 = vsel %vm527, %v799, 0.0
        %812 = vadd.xlane.f32.xlu0 %v811
        %v813 = vpop.xlane.xlu0 %812
        %v814 = vsel %vm527, %v800, 0.0
        %815 = vadd.xlane.f32.xlu0 %v814
        %v816 = vpop.xlane.xlu0 %815
        %v817 = vsel %vm527, %v801, 0.0
        %818 = vadd.xlane.f32.xlu0 %v817
        %v819 = vpop.xlane.xlu0 %818
        %v820 = vsel %vm527, %v802, 0.0
        %821 = vadd.xlane.f32.xlu0 %v820
        %v822 = vpop.xlane.xlu0 %821
        %v823 = vsel %vm527, %v803, 0.0
        %824 = vadd.xlane.f32.xlu0 %v823
        %v825 = vpop.xlane.xlu0 %824
        %v826 = vsel %vm527, %v804, 0.0
        %827 = vadd.xlane.f32.xlu0 %v826
        %v828 = vpop.xlane.xlu0 %827
        %v837 = vlaneseq
        %v838 = vand.u32 %v837, 127
        %v839 = vlaneseq
        %v840 = vshrl.u32 %v839, 7
        %v841 = vsub.s32 %v838, %v840
        %v842 = vrot.slane %v807, %v841
        %v843 = vlaneseq
        %v844 = vshrl.u32 %v843, 7
        %v845 = vsub.s32 %v838, %v844
        %v846 = vrot.slane %v810, %v845
        %v847 = vlaneseq
        %v848 = vshrl.u32 %v847, 7
        %v849 = vsub.s32 %v838, %v848
        %v850 = vrot.slane %v813, %v849
        %v851 = vlaneseq
        %v852 = vshrl.u32 %v851, 7
        %v853 = vsub.s32 %v838, %v852
        %v854 = vrot.slane %v816, %v853
        %v855 = vlaneseq
        %v856 = vshrl.u32 %v855, 7
        %v857 = vsub.s32 %v838, %v856
        %v858 = vrot.slane %v819, %v857
        %v859 = vlaneseq
        %v860 = vshrl.u32 %v859, 7
        %v861 = vsub.s32 %v838, %v860
        %v862 = vrot.slane %v822, %v861
        %v863 = vlaneseq
        %v864 = vshrl.u32 %v863, 7
        %v865 = vsub.s32 %v838, %v864
        %v866 = vrot.slane %v825, %v865
        %v867 = vlaneseq
        %v868 = vshrl.u32 %v867, 7
        %v869 = vsub.s32 %v838, %v868
        %v870 = vrot.slane %v828, %v869
        %vm871 = vcmask 1041409
        %v872 = vsel %vm871, %v846, %v842
        %vm873 = vcmask 1042434
        %v874 = vsel %vm873, %v850, %v872
        %vm875 = vcmask 1043459
        %v876 = vsel %vm875, %v854, %v874
        %vm877 = vcmask 1044484
        %v878 = vsel %vm877, %v858, %v876
        %vm879 = vcmask 1045509
        %v880 = vsel %vm879, %v862, %v878
        %vm881 = vcmask 1046534
        %v882 = vsel %vm881, %v866, %v880
        %vm883 = vcmask 1047559
        %v884 = vsel %vm883, %v870, %v882
        %vm886 = vcmask 64512
        %v887 = vsel %vm886, %v884, -inf
        %888 = vmax.xlane.f32.xlu0 %v887
        %v889 = vpop.xlane.xlu0 %888
        %v891 = vlaneseq
        %v892 = vshrl.u32 %v891, 7
        %v893 = vsub.s32 0, %v892
        %v894 = vrot.slane %v889, %v893
        %v895 = vlaneseq
        %v896 = vshrl.u32 %v895, 7
        %v897 = vsub.s32 1, %v896
        %v898 = vrot.slane %v889, %v897
        %v899 = vlaneseq
        %v900 = vshrl.u32 %v899, 7
        %v901 = vsub.s32 2, %v900
        %v902 = vrot.slane %v889, %v901
        %v903 = vlaneseq
        %v904 = vshrl.u32 %v903, 7
        %v905 = vsub.s32 3, %v904
        %v906 = vrot.slane %v889, %v905
        %v907 = vlaneseq
        %v908 = vshrl.u32 %v907, 7
        %v909 = vsub.s32 4, %v908
        %v910 = vrot.slane %v889, %v909
        %v911 = vlaneseq
        %v912 = vshrl.u32 %v911, 7
        %v913 = vsub.s32 5, %v912
        %v914 = vrot.slane %v889, %v913
        %v915 = vlaneseq
        %v916 = vshrl.u32 %v915, 7
        %v917 = vsub.s32 6, %v916
        %v918 = vrot.slane %v889, %v917
        %v919 = vlaneseq
        %v920 = vshrl.u32 %v919, 7
        %v921 = vsub.s32 7, %v920
        %v922 = vrot.slane %v889, %v921
        %v931 = vsub.f32 %v807, %v894
        %v932 = vsub.f32 %v810, %v898
        %v933 = vsub.f32 %v813, %v902
        %v934 = vsub.f32 %v816, %v906
        %v935 = vsub.f32 %v819, %v910
        %v936 = vsub.f32 %v822, %v914
        %v937 = vsub.f32 %v825, %v918
        %v938 = vsub.f32 %v828, %v922
        %v939 = vmul.f32 %v931, 1.442695
        %v940 = vpow.pop %v939
        %v941 = vmul.f32 %v932, 1.442695
        %v942 = vpow.pop %v941
        %v943 = vmul.f32 %v933, 1.442695
        %v944 = vpow.pop %v943
        %v945 = vmul.f32 %v934, 1.442695
        %v946 = vpow.pop %v945
        %v947 = vmul.f32 %v935, 1.442695
        %v948 = vpow.pop %v947
        %v949 = vmul.f32 %v936, 1.442695
        %v950 = vpow.pop %v949
        %v951 = vmul.f32 %v937, 1.442695
        %v952 = vpow.pop %v951
        %v953 = vmul.f32 %v938, 1.442695
        %v954 = vpow.pop %v953
        %963 = vset.pattern.permute.xlu0 0
        %964 = vperm.xlu0 %963, %v940
        %v965 = vpop.permute.xlu0 %964
        %966 = vset.pattern.permute.xlu0 0
        %967 = vperm.xlu0 %966, %v942
        %v968 = vpop.permute.xlu0 %967
        %969 = vset.pattern.permute.xlu0 0
        %970 = vperm.xlu0 %969, %v944
        %v971 = vpop.permute.xlu0 %970
        %972 = vset.pattern.permute.xlu0 0
        %973 = vperm.xlu0 %972, %v946
        %v974 = vpop.permute.xlu0 %973
        %975 = vset.pattern.permute.xlu0 0
        %976 = vperm.xlu0 %975, %v948
        %v977 = vpop.permute.xlu0 %976
        %978 = vset.pattern.permute.xlu0 0
        %979 = vperm.xlu0 %978, %v950
        %v980 = vpop.permute.xlu0 %979
        %981 = vset.pattern.permute.xlu0 0
        %982 = vperm.xlu0 %981, %v952
        %v983 = vpop.permute.xlu0 %982
        %984 = vset.pattern.permute.xlu0 0
        %985 = vperm.xlu0 %984, %v954
        %v986 = vpop.permute.xlu0 %985
        %v987 = vlaneseq
        %v988 = vshrl.u32 %v987, 7
        %v989 = vsub.s32 %v838, %v988
        %v990 = vrot.slane %v965, %v989
        %v991 = vlaneseq
        %v992 = vshrl.u32 %v991, 7
        %v993 = vsub.s32 %v838, %v992
        %v994 = vrot.slane %v968, %v993
        %v995 = vlaneseq
        %v996 = vshrl.u32 %v995, 7
        %v997 = vsub.s32 %v838, %v996
        %v998 = vrot.slane %v971, %v997
        %v999 = vlaneseq
        %v1000 = vshrl.u32 %v999, 7
        %v1001 = vsub.s32 %v838, %v1000
        %v1002 = vrot.slane %v974, %v1001
        %v1003 = vlaneseq
        %v1004 = vshrl.u32 %v1003, 7
        %v1005 = vsub.s32 %v838, %v1004
        %v1006 = vrot.slane %v977, %v1005
        %v1007 = vlaneseq
        %v1008 = vshrl.u32 %v1007, 7
        %v1009 = vsub.s32 %v838, %v1008
        %v1010 = vrot.slane %v980, %v1009
        %v1011 = vlaneseq
        %v1012 = vshrl.u32 %v1011, 7
        %v1013 = vsub.s32 %v838, %v1012
        %v1014 = vrot.slane %v983, %v1013
        %v1015 = vlaneseq
        %v1016 = vshrl.u32 %v1015, 7
        %v1017 = vsub.s32 %v838, %v1016
        %v1018 = vrot.slane %v986, %v1017
        %v1019 = vsel %vm871, %v994, %v990
        %v1020 = vsel %vm873, %v998, %v1019
        %v1021 = vsel %vm875, %v1002, %v1020
        %v1022 = vsel %vm877, %v1006, %v1021
        %v1023 = vsel %vm879, %v1010, %v1022
        %v1024 = vsel %vm881, %v1014, %v1023
        %v1025 = vsel %vm883, %v1018, %v1024
        %v1027 = vsel %vm886, %v1025, 0.0
        %1028 = vadd.xlane.f32.xlu0 %v1027
        %v1029 = vpop.xlane.xlu0 %1028
        %v1031 = vlaneseq
        %v1032 = vshrl.u32 %v1031, 7
        %v1033 = vsub.s32 0, %v1032
        %v1034 = vrot.slane %v1029, %v1033
        %v1035 = vlaneseq
        %v1036 = vshrl.u32 %v1035, 7
        %v1037 = vsub.s32 1, %v1036
        %v1038 = vrot.slane %v1029, %v1037
        %v1039 = vlaneseq
        %v1040 = vshrl.u32 %v1039, 7
        %v1041 = vsub.s32 2, %v1040
        %v1042 = vrot.slane %v1029, %v1041
        %v1043 = vlaneseq
        %v1044 = vshrl.u32 %v1043, 7
        %v1045 = vsub.s32 3, %v1044
        %v1046 = vrot.slane %v1029, %v1045
        %v1047 = vlaneseq
        %v1048 = vshrl.u32 %v1047, 7
        %v1049 = vsub.s32 4, %v1048
        %v1050 = vrot.slane %v1029, %v1049
        %v1051 = vlaneseq
        %v1052 = vshrl.u32 %v1051, 7
        %v1053 = vsub.s32 5, %v1052
        %v1054 = vrot.slane %v1029, %v1053
        %v1055 = vlaneseq
        %v1056 = vshrl.u32 %v1055, 7
        %v1057 = vsub.s32 6, %v1056
        %v1058 = vrot.slane %v1029, %v1057
        %v1059 = vlaneseq
        %v1060 = vshrl.u32 %v1059, 7
        %v1061 = vsub.s32 7, %v1060
        %v1062 = vrot.slane %v1029, %v1061
        %v1071 = vrcp.pop %v1034
        %v1072 = vmul.f32 %v940, %v1071
        %v1073 = vrcp.pop %v1038
        %v1074 = vmul.f32 %v942, %v1073
        %v1075 = vrcp.pop %v1042
        %v1076 = vmul.f32 %v944, %v1075
        %v1077 = vrcp.pop %v1046
        %v1078 = vmul.f32 %v946, %v1077
        %v1079 = vrcp.pop %v1050
        %v1080 = vmul.f32 %v948, %v1079
        %v1081 = vrcp.pop %v1054
        %v1082 = vmul.f32 %v950, %v1081
        %v1083 = vrcp.pop %v1058
        %v1084 = vmul.f32 %v952, %v1083
        %v1085 = vrcp.pop %v1062
        %v1086 = vmul.f32 %v954, %v1085
        %1088 = vset.pattern.permute.xlu0 0
        %1089 = vperm.xlu0 %1088, %v1072
        %v1090 = vpop.permute.xlu0 %1089
        %1093 = vset.pattern.permute.xlu0 0
        %1094 = vperm.xlu0 %1093, %v1074
        %v1095 = vpop.permute.xlu0 %1094
        %1098 = vset.pattern.permute.xlu0 0
        %1099 = vperm.xlu0 %1098, %v1076
        %v1100 = vpop.permute.xlu0 %1099
        %1103 = vset.pattern.permute.xlu0 0
        %1104 = vperm.xlu0 %1103, %v1078
        %v1105 = vpop.permute.xlu0 %1104
        %1108 = vset.pattern.permute.xlu0 0
        %1109 = vperm.xlu0 %1108, %v1080
        %v1110 = vpop.permute.xlu0 %1109
        %1113 = vset.pattern.permute.xlu0 0
        %1114 = vperm.xlu0 %1113, %v1082
        %v1115 = vpop.permute.xlu0 %1114
        %1118 = vset.pattern.permute.xlu0 0
        %1119 = vperm.xlu0 %1118, %v1084
        %v1120 = vpop.permute.xlu0 %1119
        %1123 = vset.pattern.permute.xlu0 0
        %1124 = vperm.xlu0 %1123, %v1086
        %v1125 = vpop.permute.xlu0 %1124
        %v1127 = vmul.f32 %v1090, %v500
        %v1128 = vmul.f32 %v1095, %v501
        %v1129 = vmul.f32 %v1100, %v502
        %v1130 = vmul.f32 %v1105, %v503
        %v1131 = vmul.f32 %v1110, %v504
        %v1132 = vmul.f32 %v1115, %v505
        %v1133 = vmul.f32 %v1120, %v506
        %v1134 = vmul.f32 %v1125, %v507
        %v1135 = vsel %vm527, %v1127, 0.0
        %v1136 = vrot.slane %v1135, 4
        %v1137 = vadd.f32 %v1135, %v1136
        %v1138 = vrot.slane %v1137, 2
        %v1139 = vadd.f32 %v1137, %v1138
        %v1140 = vrot.slane %v1139, 1
        %v1141 = vadd.f32 %v1139, %v1140
        %v1142 = vsel %vm527, %v1128, 0.0
        %v1143 = vrot.slane %v1142, 4
        %v1144 = vadd.f32 %v1142, %v1143
        %v1145 = vrot.slane %v1144, 2
        %v1146 = vadd.f32 %v1144, %v1145
        %v1147 = vrot.slane %v1146, 1
        %v1148 = vadd.f32 %v1146, %v1147
        %v1149 = vsel %vm527, %v1129, 0.0
        %v1150 = vrot.slane %v1149, 4
        %v1151 = vadd.f32 %v1149, %v1150
        %v1152 = vrot.slane %v1151, 2
        %v1153 = vadd.f32 %v1151, %v1152
        %v1154 = vrot.slane %v1153, 1
        %v1155 = vadd.f32 %v1153, %v1154
        %v1156 = vsel %vm527, %v1130, 0.0
        %v1157 = vrot.slane %v1156, 4
        %v1158 = vadd.f32 %v1156, %v1157
        %v1159 = vrot.slane %v1158, 2
        %v1160 = vadd.f32 %v1158, %v1159
        %v1161 = vrot.slane %v1160, 1
        %v1162 = vadd.f32 %v1160, %v1161
        %v1163 = vsel %vm527, %v1131, 0.0
        %v1164 = vrot.slane %v1163, 4
        %v1165 = vadd.f32 %v1163, %v1164
        %v1166 = vrot.slane %v1165, 2
        %v1167 = vadd.f32 %v1165, %v1166
        %v1168 = vrot.slane %v1167, 1
        %v1169 = vadd.f32 %v1167, %v1168
        %v1170 = vsel %vm527, %v1132, 0.0
        %v1171 = vrot.slane %v1170, 4
        %v1172 = vadd.f32 %v1170, %v1171
        %v1173 = vrot.slane %v1172, 2
        %v1174 = vadd.f32 %v1172, %v1173
        %v1175 = vrot.slane %v1174, 1
        %v1176 = vadd.f32 %v1174, %v1175
        %v1177 = vsel %vm527, %v1133, 0.0
        %v1178 = vrot.slane %v1177, 4
        %v1179 = vadd.f32 %v1177, %v1178
        %v1180 = vrot.slane %v1179, 2
        %v1181 = vadd.f32 %v1179, %v1180
        %v1182 = vrot.slane %v1181, 1
        %v1183 = vadd.f32 %v1181, %v1182
        %v1184 = vsel %vm527, %v1134, 0.0
        %v1185 = vrot.slane %v1184, 4
        %v1186 = vadd.f32 %v1184, %v1185
        %v1187 = vrot.slane %v1186, 2
        %v1188 = vadd.f32 %v1186, %v1187
        %v1189 = vrot.slane %v1188, 1
        %v1190 = vadd.f32 %v1188, %v1189
        %v1191 = vld [vmem:[%s5] sm:$0xff]
        %v1192 = vld [vmem:[%s5 + $0x8] sm:$0xff]
        %v1193 = vld [vmem:[%s5 + $0x10] sm:$0xff]
        %v1194 = vld [vmem:[%s5 + $0x18] sm:$0xff]
        %v1195 = vld [vmem:[%s5 + $0x20] sm:$0xff]
        %v1196 = vld [vmem:[%s5 + $0x28] sm:$0xff]
        %v1205 = vsel %vm871, %v1148, %v1141
        %v1206 = vsel %vm873, %v1155, %v1205
        %v1207 = vsel %vm875, %v1162, %v1206
        %v1208 = vsel %vm877, %v1169, %v1207
        %v1209 = vsel %vm879, %v1176, %v1208
        %v1210 = vsel %vm881, %v1183, %v1209
        %v1211 = vsel %vm883, %v1190, %v1210
        %v1212 = vsel %vm527, %v1211, 0
        %1214 = vmatprep.subr.mxu0 0.0
        %1215 = vmatpush1.msra.mxu0 %v1193
        %1216 = vmatprep.subr.mxu0 0.0
        %1217 = vmatpush1.msra.mxu0 %v1194
        %1218 = vmatprep.subr.mxu0 0.0
        %1219 = vmatpush1.msra.mxu0 %v1195
        %1220 = vmatprep.subr.mxu0 0.0
        %1221 = vmatpush1.msra.mxu0 %v1196
        %1222 = vmatprep.subr.mxu0 0.0
        %1223 = vmatpush1.msra.mxu0 0.0
        %1224 = vmatprep.subr.mxu0 0.0
        %1225 = vmatpush1.msra.mxu0 0.0
        %1226 = vmatprep.subr.mxu0 0.0
        %1227 = vmatpush1.msra.mxu0 0.0
        %1228 = vmatprep.subr.mxu0 0.0
        %1229 = vmatpush1.msra.mxu0 0.0
        %1230 = vmatprep.subr.mxu0 0.0
        %1231 = vmatpush1.msra.mxu0 0.0
        %1232 = vmatprep.subr.mxu0 0.0
        %1233 = vmatpush1.msra.mxu0 0.0
        %1234 = vmatprep.subr.mxu0 0.0
        %1235 = vmatpush1.msra.mxu0 0.0
        %1236 = vmatprep.subr.mxu0 0.0
        %1237 = vmatpush1.msra.mxu0 0.0
        %1238 = vmatprep.subr.mxu0 0.0
        %1239 = vmatpush1.msra.mxu0 0.0
        %1240 = vmatprep.subr.mxu0 0.0
        %1241 = vmatpush1.msra.mxu0 0.0
        %1242 = vmatprep.subr.mxu0 0.0
        %1243 = vmatpush1.msra.mxu0 0.0
        %1244 = vmatprep.subr.mxu0 0.0
        %1245 = vmatpush1.msra.mxu0 0.0
        %1246 = vmatprep.subr.mxu0 0.0
        %1247 = vmatpush1.msra.mxu0 0.0
        %1248 = vmatprep.subr.mxu0 0.0
        %1249 = vmatpush1.msra.mxu0 0.0
        %1250 = vmatprep.subr.mxu0 0.0
        %1251 = vmatpush1.msra.mxu0 0.0
        %1252 = vmatprep.subr.mxu0 0.0
        %1253 = vmatpush1.msra.mxu0 0.0
        %1254 = vmatprep.subr.mxu0 0.0
        %1255 = vmatpush1.msra.mxu0 0.0
        %1256 = vmatprep.subr.mxu0 0.0
        %1257 = vmatpush1.msra.mxu0 0.0
        %1258 = vmatprep.subr.mxu0 0.0
        %1259 = vmatpush1.msra.mxu0 0.0
        %1260 = vmatprep.subr.mxu0 0.0
        %1261 = vmatpush1.msra.mxu0 0.0
        %1262 = vmatprep.subr.mxu0 0.0
        %1263 = vmatpush1.msra.mxu0 0.0
        %1264 = vmatprep.subr.mxu0 0.0
        %1265 = vmatpush1.msra.mxu0 0.0
        %1266 = vmatprep.subr.mxu0 0.0
        %1267 = vmatpush1.msra.mxu0 0.0
        %1268 = vmatprep.subr.mxu0 0.0
        %1269 = vmatpush1.msra.mxu0 0.0
        %1270 = vmatprep.subr.mxu0 0.0
        %1271 = vmatpush1.msra.mxu0 0.0
        %1272 = vmatprep.subr.mxu0 0.0
        %1273 = vmatpush1.msra.mxu0 0.0
        %1274 = vmatprep.subr.mxu0 0.0
        %1275 = vmatpush1.msra.mxu0 0.0
        %1276 = vmatprep.subr.mxu0 0.0
        %1277 = vmatpush1.msra.mxu0 0.0
        %1278 = vmatprep.mubr.f32.mxu0 0.0
        %1279 = vmatmul.mubr.f32.gmra.mrb[0].mxu0 %v1212
        %v1280 = vpop.f32.mrb[0].mxu0
        %v1281 = vadd.f32 0.0, %v1280
        %v1282 = vpop.f32.mrb[0].mxu0
        %1283 = vdwg.mxu0
        %vm1284 = vcmask 130048
        %v1286 = vsel %vm1284, %v498, 0
        %1288 = vmatprep.subr.mxu0 0.0
        %1289 = vmatpush1.msra.mxu0 %v1191
        %1290 = vmatprep.subr.mxu0 0.0
        %1291 = vmatpush1.msra.mxu0 %v1192
        %1292 = vmatprep.subr.mxu0 0.0
        %1293 = vmatpush1.msra.mxu0 0.0
        %1294 = vmatprep.subr.mxu0 0.0
        %1295 = vmatpush1.msra.mxu0 0.0
        %1296 = vmatprep.subr.mxu0 0.0
        %1297 = vmatpush1.msra.mxu0 0.0
        %1298 = vmatprep.subr.mxu0 0.0
        %1299 = vmatpush1.msra.mxu0 0.0
        %1300 = vmatprep.subr.mxu0 0.0
        %1301 = vmatpush1.msra.mxu0 0.0
        %1302 = vmatprep.subr.mxu0 0.0
        %1303 = vmatpush1.msra.mxu0 0.0
        %1304 = vmatprep.subr.mxu0 0.0
        %1305 = vmatpush1.msra.mxu0 0.0
        %1306 = vmatprep.subr.mxu0 0.0
        %1307 = vmatpush1.msra.mxu0 0.0
        %1308 = vmatprep.subr.mxu0 0.0
        %1309 = vmatpush1.msra.mxu0 0.0
        %1310 = vmatprep.subr.mxu0 0.0
        %1311 = vmatpush1.msra.mxu0 0.0
        %1312 = vmatprep.subr.mxu0 0.0
        %1313 = vmatpush1.msra.mxu0 0.0
        %1314 = vmatprep.subr.mxu0 0.0
        %1315 = vmatpush1.msra.mxu0 0.0
        %1316 = vmatprep.subr.mxu0 0.0
        %1317 = vmatpush1.msra.mxu0 0.0
        %1318 = vmatprep.subr.mxu0 0.0
        %1319 = vmatpush1.msra.mxu0 0.0
        %1320 = vmatprep.subr.mxu0 0.0
        %1321 = vmatpush1.msra.mxu0 0.0
        %1322 = vmatprep.subr.mxu0 0.0
        %1323 = vmatpush1.msra.mxu0 0.0
        %1324 = vmatprep.subr.mxu0 0.0
        %1325 = vmatpush1.msra.mxu0 0.0
        %1326 = vmatprep.subr.mxu0 0.0
        %1327 = vmatpush1.msra.mxu0 0.0
        %1328 = vmatprep.subr.mxu0 0.0
        %1329 = vmatpush1.msra.mxu0 0.0
        %1330 = vmatprep.subr.mxu0 0.0
        %1331 = vmatpush1.msra.mxu0 0.0
        %1332 = vmatprep.subr.mxu0 0.0
        %1333 = vmatpush1.msra.mxu0 0.0
        %1334 = vmatprep.subr.mxu0 0.0
        %1335 = vmatpush1.msra.mxu0 0.0
        %1336 = vmatprep.subr.mxu0 0.0
        %1337 = vmatpush1.msra.mxu0 0.0
        %1338 = vmatprep.subr.mxu0 0.0
        %1339 = vmatpush1.msra.mxu0 0.0
        %1340 = vmatprep.subr.mxu0 0.0
        %1341 = vmatpush1.msra.mxu0 0.0
        %1342 = vmatprep.subr.mxu0 0.0
        %1343 = vmatpush1.msra.mxu0 0.0
        %1344 = vmatprep.subr.mxu0 0.0
        %1345 = vmatpush1.msra.mxu0 0.0
        %1346 = vmatprep.subr.mxu0 0.0
        %1347 = vmatpush1.msra.mxu0 0.0
        %1348 = vmatprep.subr.mxu0 0.0
        %1349 = vmatpush1.msra.mxu0 0.0
        %1350 = vmatprep.subr.mxu0 0.0
        %1351 = vmatpush1.msra.mxu0 0.0
        %1352 = vmatprep.mubr.f32.mxu0 0.0
        %1353 = vmatmul.mubr.f32.gmra.mrb[0].mxu0 %v1286
        %v1354 = vpop.f32.mrb[0].mxu0
        %v1355 = vadd.f32 %v1281, %v1354
        %v1356 = vpop.f32.mrb[0].mxu0
        %1357 = vdwg.mxu0
        %v1358 = vadd.f32 %v1355, %v517
        %v1359 = vsel %vm527, %v1358, 0.0
        %v1360 = vrot.slane %v1359, 4
        %v1361 = vadd.f32 %v1359, %v1360
        %v1362 = vrot.slane %v1361, 2
        %v1363 = vadd.f32 %v1361, %v1362
        %v1364 = vrot.slane %v1363, 1
        %v1365 = vadd.f32 %v1363, %v1364
        %v1366 = vrcp.pop 8.0
        %v1367 = vmul.f32 %v1365, %v1366
        %v1368 = vsub.f32 %v1358, %v1367
        %v1369 = vmul.f32 %v1368, %v1368
        %v1370 = vsel %vm527, %v1369, 0.0
        %v1371 = vrot.slane %v1370, 4
        %v1372 = vadd.f32 %v1370, %v1371
        %v1373 = vrot.slane %v1372, 2
        %v1374 = vadd.f32 %v1372, %v1373
        %v1375 = vrot.slane %v1374, 1
        %v1376 = vadd.f32 %v1374, %v1375
        %v1377 = vmul.f32 %v1376, %v1366
        %v1378 = vadd.f32 %v1377, 1e-05
        %v1379 = vrsqrt.pop %v1378
        %v1380 = vmul.f32 %v1368, %v1379
        %v1381 = vmul.f32 %v1380, %v518
        %v1382 = vadd.f32 %v1381, %v519
        %v1383 = vmax.f32 %v1382, 0.0
        %v1384 = vld [vmem:[%s6] sm:$0xff]
        %v1385 = vld [vmem:[%s6 + $0x8] sm:$0xff]
        %v1386 = vld [vmem:[%s6 + $0x10] sm:$0xff]
        %v1387 = vld [vmem:[%s6 + $0x18] sm:$0xff]
        %v1389 = vsel %vm527, %v1383, 0
        %1391 = vmatprep.subr.mxu0 0.0
        %1392 = vmatpush1.msra.mxu0 %v1384
        %1393 = vmatprep.subr.mxu0 0.0
        %1394 = vmatpush1.msra.mxu0 %v1385
        %1395 = vmatprep.subr.mxu0 0.0
        %1396 = vmatpush1.msra.mxu0 %v1386
        %1397 = vmatprep.subr.mxu0 0.0
        %1398 = vmatpush1.msra.mxu0 %v1387
        %1399 = vmatprep.subr.mxu0 0.0
        %1400 = vmatpush1.msra.mxu0 0.0
        %1401 = vmatprep.subr.mxu0 0.0
        %1402 = vmatpush1.msra.mxu0 0.0
        %1403 = vmatprep.subr.mxu0 0.0
        %1404 = vmatpush1.msra.mxu0 0.0
        %1405 = vmatprep.subr.mxu0 0.0
        %1406 = vmatpush1.msra.mxu0 0.0
        %1407 = vmatprep.subr.mxu0 0.0
        %1408 = vmatpush1.msra.mxu0 0.0
        %1409 = vmatprep.subr.mxu0 0.0
        %1410 = vmatpush1.msra.mxu0 0.0
        %1411 = vmatprep.subr.mxu0 0.0
        %1412 = vmatpush1.msra.mxu0 0.0
        %1413 = vmatprep.subr.mxu0 0.0
        %1414 = vmatpush1.msra.mxu0 0.0
        %1415 = vmatprep.subr.mxu0 0.0
        %1416 = vmatpush1.msra.mxu0 0.0
        %1417 = vmatprep.subr.mxu0 0.0
        %1418 = vmatpush1.msra.mxu0 0.0
        %1419 = vmatprep.subr.mxu0 0.0
        %1420 = vmatpush1.msra.mxu0 0.0
        %1421 = vmatprep.subr.mxu0 0.0
        %1422 = vmatpush1.msra.mxu0 0.0
        %1423 = vmatprep.subr.mxu0 0.0
        %1424 = vmatpush1.msra.mxu0 0.0
        %1425 = vmatprep.subr.mxu0 0.0
        %1426 = vmatpush1.msra.mxu0 0.0
        %1427 = vmatprep.subr.mxu0 0.0
        %1428 = vmatpush1.msra.mxu0 0.0
        %1429 = vmatprep.subr.mxu0 0.0
        %1430 = vmatpush1.msra.mxu0 0.0
        %1431 = vmatprep.subr.mxu0 0.0
        %1432 = vmatpush1.msra.mxu0 0.0
        %1433 = vmatprep.subr.mxu0 0.0
        %1434 = vmatpush1.msra.mxu0 0.0
        %1435 = vmatprep.subr.mxu0 0.0
        %1436 = vmatpush1.msra.mxu0 0.0
        %1437 = vmatprep.subr.mxu0 0.0
        %1438 = vmatpush1.msra.mxu0 0.0
        %1439 = vmatprep.subr.mxu0 0.0
        %1440 = vmatpush1.msra.mxu0 0.0
        %1441 = vmatprep.subr.mxu0 0.0
        %1442 = vmatpush1.msra.mxu0 0.0
        %1443 = vmatprep.subr.mxu0 0.0
        %1444 = vmatpush1.msra.mxu0 0.0
        %1445 = vmatprep.subr.mxu0 0.0
        %1446 = vmatpush1.msra.mxu0 0.0
        %1447 = vmatprep.subr.mxu0 0.0
        %1448 = vmatpush1.msra.mxu0 0.0
        %1449 = vmatprep.subr.mxu0 0.0
        %1450 = vmatpush1.msra.mxu0 0.0
        %1451 = vmatprep.subr.mxu0 0.0
        %1452 = vmatpush1.msra.mxu0 0.0
        %1453 = vmatprep.subr.mxu0 0.0
        %1454 = vmatpush1.msra.mxu0 0.0
        %1455 = vmatprep.mubr.f32.mxu0 0.0
        %1456 = vmatmul.mubr.f32.gmra.mrb[0].mxu0 %v1389
        %v1457 = vpop.f32.mrb[0].mxu0
        %v1458 = vadd.f32 0.0, %v1457
        %v1459 = vpop.f32.mrb[0].mxu0
        %1460 = vdwg.mxu0
        %v1461 = vadd.f32 %v1458, %v520
        %1462 = vrot.lane.b32.xlu0 %v598, 96
        %v1463 = vpop.permute.xlu0 %1462
        %v1465 = vadd.f32 %v1461, %v1463
        %v1466 = vxor.u32 %v1465, 2147483648
        %v1467 = vmul.f32 %v1466, 1.442695
        %v1468 = vpow.pop %v1467
        %v1469 = vadd.f32 %v1468, 1.0
        %v1470 = vrcp.pop %v1469
        %v1471 = vmul.f32 1.0, %v1470
        %1472 = vrot.lane.b32.xlu0 %v598, 32
        %v1473 = vpop.permute.xlu0 %1472
        %v1475 = vmul.f32 %v1471, %v1473
        %1477 = vrot.lane.b32.xlu0 %v1475, 64
        %v1478 = vpop.permute.xlu0 %1477
        %v1480 = vadd.f32 %v1461, %v1478
        %v1481 = vtanh.pop %v1480
        %v1482 = vsub.f32 1.0, %v1471
        %1484 = vrot.lane.b32.xlu0 %v1481, 96
        %v1485 = vpop.permute.xlu0 %1484
        %v1487 = vmul.f32 %v1482, %v1485
        %1488 = vrot.lane.b32.xlu0 %v499, 32
        %v1489 = vpop.permute.xlu0 %1488
        %v1491 = vmul.f32 %v1471, %v1489
        %v1492 = vadd.f32 %v1487, %v1491
        %v1493 = vld [vmem:[#allocation11] sm:$0xff]
        %v1494 = vld [vmem:[#allocation11 + $0x8] sm:$0xff]
        %v1495 = vld [vmem:[#allocation11 + $0x10] sm:$0xff]
        %v1496 = vld [vmem:[#allocation11 + $0x18] sm:$0xff]
        %1498 = vrot.lane.b32.xlu0 %v1492, 96
        %v1499 = vpop.permute.xlu0 %1498
        %v1500 = vsel %vm527, %v1499, 0
        %1502 = vmatprep.subr.mxu0 0.0
        %1503 = vmatpush1.msra.mxu0 %v1493
        %1504 = vmatprep.subr.mxu0 0.0
        %1505 = vmatpush1.msra.mxu0 %v1494
        %1506 = vmatprep.subr.mxu0 0.0
        %1507 = vmatpush1.msra.mxu0 %v1495
        %1508 = vmatprep.subr.mxu0 0.0
        %1509 = vmatpush1.msra.mxu0 %v1496
        %1510 = vmatprep.subr.mxu0 0.0
        %1511 = vmatpush1.msra.mxu0 0.0
        %1512 = vmatprep.subr.mxu0 0.0
        %1513 = vmatpush1.msra.mxu0 0.0
        %1514 = vmatprep.subr.mxu0 0.0
        %1515 = vmatpush1.msra.mxu0 0.0
        %1516 = vmatprep.subr.mxu0 0.0
        %1517 = vmatpush1.msra.mxu0 0.0
        %1518 = vmatprep.subr.mxu0 0.0
        %1519 = vmatpush1.msra.mxu0 0.0
        %1520 = vmatprep.subr.mxu0 0.0
        %1521 = vmatpush1.msra.mxu0 0.0
        %1522 = vmatprep.subr.mxu0 0.0
        %1523 = vmatpush1.msra.mxu0 0.0
        %1524 = vmatprep.subr.mxu0 0.0
        %1525 = vmatpush1.msra.mxu0 0.0
        %1526 = vmatprep.subr.mxu0 0.0
        %1527 = vmatpush1.msra.mxu0 0.0
        %1528 = vmatprep.subr.mxu0 0.0
        %1529 = vmatpush1.msra.mxu0 0.0
        %1530 = vmatprep.subr.mxu0 0.0
        %1531 = vmatpush1.msra.mxu0 0.0
        %1532 = vmatprep.subr.mxu0 0.0
        %1533 = vmatpush1.msra.mxu0 0.0
        %1534 = vmatprep.subr.mxu0 0.0
        %1535 = vmatpush1.msra.mxu0 0.0
        %1536 = vmatprep.subr.mxu0 0.0
        %1537 = vmatpush1.msra.mxu0 0.0
        %1538 = vmatprep.subr.mxu0 0.0
        %1539 = vmatpush1.msra.mxu0 0.0
        %1540 = vmatprep.subr.mxu0 0.0
        %1541 = vmatpush1.msra.mxu0 0.0
        %1542 = vmatprep.subr.mxu0 0.0
        %1543 = vmatpush1.msra.mxu0 0.0
        %1544 = vmatprep.subr.mxu0 0.0
        %1545 = vmatpush1.msra.mxu0 0.0
        %1546 = vmatprep.subr.mxu0 0.0
        %1547 = vmatpush1.msra.mxu0 0.0
        %1548 = vmatprep.subr.mxu0 0.0
        %1549 = vmatpush1.msra.mxu0 0.0
        %1550 = vmatprep.subr.mxu0 0.0
        %1551 = vmatpush1.msra.mxu0 0.0
        %1552 = vmatprep.subr.mxu0 0.0
        %1553 = vmatpush1.msra.mxu0 0.0
        %1554 = vmatprep.subr.mxu0 0.0
        %1555 = vmatpush1.msra.mxu0 0.0
        %1556 = vmatprep.subr.mxu0 0.0
        %1557 = vmatpush1.msra.mxu0 0.0
        %1558 = vmatprep.subr.mxu0 0.0
        %1559 = vmatpush1.msra.mxu0 0.0
        %1560 = vmatprep.subr.mxu0 0.0
        %1561 = vmatpush1.msra.mxu0 0.0
        %1562 = vmatprep.subr.mxu0 0.0
        %1563 = vmatpush1.msra.mxu0 0.0
        %1564 = vmatprep.subr.mxu0 0.0
        %1565 = vmatpush1.msra.mxu0 0.0
        %1566 = vmatprep.mubr.f32.mxu0 0.0
        %1567 = vmatmul.mubr.f32.gmra.mrb[0].mxu0 %v1500
        %v1568 = vpop.f32.mrb[0].mxu0
        %v1569 = vadd.f32 0.0, %v1568
        %v1570 = vpop.f32.mrb[0].mxu0
        %1571 = vdwg.mxu0
        %v1572 = vadd.f32 %v1569, %v522
        %1574 = vst.msk [vmem:[#allocation2] sm:$0xff] %vm527, %v1499
        %1575 = vst.msk [vmem:[%s476] sm:$0xff] %vm1284, %v1572
        %1576 = vst.msk [vmem:[%s483] sm:$0xff] %vm527, %v1499
        %v1577 = vlaneseq
        %v1578 = vshrl.u32 %v1577, 7
        %v1579 = vsub.s32 %v838, %v1578
        %v1580 = vrot.slane %v1090, %v1579
        %v1581 = vlaneseq
        %v1582 = vshrl.u32 %v1581, 7
        %v1583 = vsub.s32 %v838, %v1582
        %v1584 = vrot.slane %v1095, %v1583
        %v1585 = vlaneseq
        %v1586 = vshrl.u32 %v1585, 7
        %v1587 = vsub.s32 %v838, %v1586
        %v1588 = vrot.slane %v1100, %v1587
        %v1589 = vlaneseq
        %v1590 = vshrl.u32 %v1589, 7
        %v1591 = vsub.s32 %v838, %v1590
        %v1592 = vrot.slane %v1105, %v1591
        %v1593 = vlaneseq
        %v1594 = vshrl.u32 %v1593, 7
        %v1595 = vsub.s32 %v838, %v1594
        %v1596 = vrot.slane %v1110, %v1595
        %v1597 = vlaneseq
        %v1598 = vshrl.u32 %v1597, 7
        %v1599 = vsub.s32 %v838, %v1598
        %v1600 = vrot.slane %v1115, %v1599
        %v1601 = vlaneseq
        %v1602 = vshrl.u32 %v1601, 7
        %v1603 = vsub.s32 %v838, %v1602
        %v1604 = vrot.slane %v1120, %v1603
        %v1605 = vlaneseq
        %v1606 = vshrl.u32 %v1605, 7
        %v1607 = vsub.s32 %v838, %v1606
        %v1608 = vrot.slane %v1125, %v1607
        %v1609 = vsel %vm871, %v1584, %v1580
        %v1610 = vsel %vm873, %v1588, %v1609
        %v1611 = vsel %vm875, %v1592, %v1610
        %v1612 = vsel %vm877, %v1596, %v1611
        %v1613 = vsel %vm879, %v1600, %v1612
        %v1614 = vsel %vm881, %v1604, %v1613
        %v1615 = vsel %vm883, %v1608, %v1614
        %1617 = vst.msk [vmem:[%s490] sm:$0xff] %vm886, %v1615
        %s1618 = sand.u32 %s237, 1
        %s1619 = scalar_lea.sflag [#allocation5], %s1618
        %s1620 = sand.u32 %s237, 1
        %s1621 = smul.addr %s1620, 8
        %s1622 = scalar_lea.vmem [#allocation14], %s1621
        %s1623 = sand.u32 %s35, 1
        %s1624 = scalar_lea.sflag [#allocation16], %s1623
        %s1625 = sand.u32 %s263, 1
        %s1626 = smul.addr %s1625, 8
        %s1627 = scalar_lea.vmem [#allocation15], %s1626
        %s1628 = sand.u32 %s35, 1
        %s1629 = scalar_lea.sflag [#allocation16], %s1628
        %s1630 = sand.u32 %s289, 1
        %s1631 = smul.addr %s1630, 8
        %s1632 = scalar_lea.vmem [#allocation17], %s1631
        // Predicated region
        $region85: #{tpu_custom_call.1} parent=55 // pred_check
          %p1633 = pneg %p247
        $region86: #{tpu_custom_call.1} parent=55 // pred_check_branch
          %1635 = sbr.rel (%p1633) target = $region88
        $region87: #{tpu_custom_call.1} parent=55 // pred_region
          %s1637 = ssub.s32 128, 128
          %1638 = vsyncadd %s1619, %s1637
          %s1639 = smul.addr %s35, 128
          %s1640 = scalar_lea.hbm %s9, %s1639
          %s1642 = sshll.u32 %s1622, 4
          %s1643 = int_to_ptr.vmem [resolvable:$true] %s1642
          %1645 = dma.vmem_to_hbm [thread:$0]  %s1643, 128, %s1640, %s1619
        $region88: #{tpu_custom_call.1} parent=55 // pred_fallthru
          _
        // Predicated region
        $region89: #{tpu_custom_call.1} parent=55 // pred_check
          %p1646 = pneg %p273
        $region90: #{tpu_custom_call.1} parent=55 // pred_check_branch
          %1648 = sbr.rel (%p1646) target = $region92
        $region91: #{tpu_custom_call.1} parent=55 // pred_region
          %s1650 = ssub.s32 128, 128
          %1651 = vsyncadd %s1624, %s1650
          %s1652 = smul.addr %s35, 128
          %s1653 = scalar_lea.hbm %s10, %s1652
          %s1655 = sshll.u32 %s1627, 4
          %s1656 = int_to_ptr.vmem [resolvable:$true] %s1655
          %1658 = dma.vmem_to_hbm [thread:$0]  %s1656, 128, %s1653, %s1624
        $region92: #{tpu_custom_call.1} parent=55 // pred_fallthru
          _
        // Predicated region
        $region93: #{tpu_custom_call.1} parent=55 // pred_check
          %p1659 = pneg %p299
        $region94: #{tpu_custom_call.1} parent=55 // pred_check_branch
          %1661 = sbr.rel (%p1659) target = $region96
        $region95: #{tpu_custom_call.1} parent=55 // pred_region
          %s1663 = ssub.s32 128, 128
          %1664 = vsyncadd %s1629, %s1663
          %s1665 = smul.addr %s35, 128
          %s1666 = scalar_lea.hbm %s11, %s1665
          %s1668 = sshll.u32 %s1632, 4
          %s1669 = int_to_ptr.vmem [resolvable:$true] %s1668
          %1671 = dma.vmem_to_hbm [thread:$0]  %s1669, 128, %s1666, %s1629
        $region96: #{tpu_custom_call.1} parent=55 // pred_fallthru
          _
      $region56: #{tpu_custom_call.1} parent=5 // pred_fallthru
        _
      %p1672 = scmp.le.s32.totalorder 2, %s30
      // Predicated region
      $region97: #{tpu_custom_call.1} parent=5 // pred_check
        %p1673 = pneg %p1672
      $region98: #{tpu_custom_call.1} parent=5 // pred_check_branch
        %1675 = sbr.rel (%p1673) target = $region100
      $region99: #{tpu_custom_call.1} parent=5 // pred_region
        %s1676 = ssub.s32 %s30, 2
        // Predicated region
        $region101: #{tpu_custom_call.1} parent=99 // pred_check
          %p1677 = pneg %p253
        $region102: #{tpu_custom_call.1} parent=99 // pred_check_branch
          %1679 = sbr.rel (%p1677) target = $region104
        $region103: #{tpu_custom_call.1} parent=99 // pred_region
          %s1680 = sand.u32 %s238, 1
          %s1681 = scalar_lea.sflag [#allocation5], %s1680
          %s1682 = sand.u32 %s238, 1
          %s1683 = smul.addr %s1682, 8
          %s1684 = scalar_lea.vmem [#allocation14], %s1683
          %1685 = dma.done %s1681, 128
        $region104: #{tpu_custom_call.1} parent=99 // pred_fallthru
          _
        // Predicated region
        $region105: #{tpu_custom_call.1} parent=99 // pred_check
          %p1686 = pneg %p279
        $region106: #{tpu_custom_call.1} parent=99 // pred_check_branch
          %1688 = sbr.rel (%p1686) target = $region108
        $region107: #{tpu_custom_call.1} parent=99 // pred_region
          %s1689 = sand.u32 %s36, 1
          %s1690 = scalar_lea.sflag [#allocation16], %s1689
          %s1691 = sand.u32 %s264, 1
          %s1692 = smul.addr %s1691, 8
          %s1693 = scalar_lea.vmem [#allocation15], %s1692
          %1694 = dma.done %s1690, 128
        $region108: #{tpu_custom_call.1} parent=99 // pred_fallthru
          _
        // Predicated region
        $region109: #{tpu_custom_call.1} parent=99 // pred_check
          %p1695 = pneg %p305
        $region110: #{tpu_custom_call.1} parent=99 // pred_check_branch
          %1697 = sbr.rel (%p1695) target = $region112
        $region111: #{tpu_custom_call.1} parent=99 // pred_region
          %s1698 = sand.u32 %s36, 1
          %s1699 = scalar_lea.sflag [#allocation16], %s1698
          %s1700 = sand.u32 %s290, 1
          %s1701 = smul.addr %s1700, 8
          %s1702 = scalar_lea.vmem [#allocation17], %s1701
          %1703 = dma.done %s1699, 128
        $region112: #{tpu_custom_call.1} parent=99 // pred_fallthru
          _
      $region100: #{tpu_custom_call.1} parent=5 // pred_fallthru
        _
    $region6: #{tpu_custom_call.1} parent=1 // loop_footer
      %s34 = sadd.s32 1, %s30
    $region7: #{tpu_custom_call.1} parent=1 // loop_footer_branch
      %29 = sbr.rel target = $region3
    $region8: #{tpu_custom_call.1} parent=1 // loop_exit
      _
    %1704 = vsyncpa [#allocation4], 1
    %s1705 = scalar_lea.sflag [#allocation4], 1
    %1706 = vsyncpa %s1705, 1
    %1707 = vsyncpa [#allocation7], 1
    %1708 = vsyncpa [#allocation10], 1
    %1709 = vsyncpa [#allocation13], 1
    %1710 = vsyncpa [#allocation5], 1
    %s1711 = scalar_lea.sflag [#allocation5], 1
    %1712 = vsyncpa %s1711, 1
    %1713 = vsyncpa [#allocation16], 1
    %s1714 = scalar_lea.sflag [#allocation16], 1
    %1715 = vsyncpa %s1714, 1

</llo_original>
